<compile_context>
chip_gen: v6e
topology: v6e:2x2x1
jax: 0.10.0
libtpu: 0.0.40
codegen_flags: <defaults>
</compile_context>

<pallas_src>
import functools

import jax
import jax.numpy as jnp
import numpy as np
from jax.experimental import pallas as pl
from jax.experimental.pallas import tpu as pltpu

# ----- static problem sizes -----
V = 50      # input vocab size (embedding rows)
E = 16      # embedding size
H = 32      # hidden size
L = 2       # nr_layers
O = 24      # output size
B = 4       # batch
S = 8       # encoder source length

VP = 64     # vocab padded (one-hot lane width == emb-gate-table rows), multiple of 8
G = 4 * H   # gate width = 128 -> the packed weight buffer is lane-dense

# ----- packed-weight row offsets (all multiples of 8 => aligned, copy-free static slices) -----
EMB_GATE_OFF = 0                            # rows [0, VP): emb_table @ W_ih_l0[:E]   (VP, 4H)
_off = VP
LSTM_IN_OFF = []
LSTM_HH_OFF = []
for _l in range(L):
    LSTM_IN_OFF.append(_off); _off += H     # l=0: context part of W_ih ; l>0: W_ih (input = h below)
    LSTM_HH_OFF.append(_off); _off += H     # W_hh
LSTM_B_OFF = []
for _l in range(L):
    LSTM_B_OFF.append(_off); _off += 8      # per-layer LSTM bias row
WH_ATT_OFF = _off; _off += H                # attention Wh   (H, H)  lanes [0, H)
WE_ATT_OFF = _off; _off += H                # attention We   (H, H)  lanes [0, H)
B_ATT_OFF = _off; _off += 8                 # attention bias (1, H)  lanes [0, H)
V_ATT_OFF = _off; _off += 8                 # attention v    (1, H)  lanes [0, H)
W_FCH_OFF = _off; _off += H                 # fc weight (rnn-output half), lanes [0, O)
W_FCC_OFF = _off; _off += H                 # fc weight (context half),    lanes [0, O)
B_FC_OFF = _off; _off += 8                  # fc bias, lanes [0, O)
TOTAL_ROWS = _off                           # 360 rows x 128 lanes x 4 B  (~180 KiB, one DMA)


def decoder_attention_kernel(
    tok_ref,        # SMEM (B,) int32            token ids
    state_ref,      # (2L, B, H)                 [h_0..h_{L-1}, c_0..c_{L-1}]
    enc_ref,        # (B*S, H)                   encoder outputs, batch-major rows (b, s)
    w_ref,          # (TOTAL_ROWS, 4H)           single packed weight buffer
    out_ref,        # (B, O)
    state_new_ref,  # (2L, B, H)                 aliased with state_ref
):
    f32 = jnp.float32
    enc2 = enc_ref[...]                                     # (B*S, H)
    enc3 = enc2.reshape(B, S, H)                            # second-minor = S = 8 (sublane aligned)
    dec_h = state_ref[L - 1]                                # hidden[-1], (B, H)

    # ---- additive attention: un-fused matmuls, no dec_h replication, no lane concat ----
    w_e = w_ref[WE_ATT_OFF:WE_ATT_OFF + H, :H]              # (H, H)
    w_h = w_ref[WH_ATT_OFF:WH_ATT_OFF + H, :H]              # (H, H)
    b_att = w_ref[B_ATT_OFF:B_ATT_OFF + 1, :H]              # (1, H)
    v_att = w_ref[V_ATT_OFF:V_ATT_OFF + 1, :H]              # (1, H)
    e_proj = jnp.dot(enc2, w_e, preferred_element_type=f32).reshape(B, S, H)
    h_proj = jnp.dot(dec_h, w_h, preferred_element_type=f32) + b_att            # (B, H)
    energy = jnp.tanh(e_proj + h_proj[:, None, :])                              # (B, S, H)
    scores = jnp.sum(energy * v_att.reshape(1, 1, H), axis=2, keepdims=True)    # (B, S, 1)
    m = jnp.max(scores, axis=1, keepdims=True)
    ex = jnp.exp(scores - m)
    attn = ex / jnp.sum(ex, axis=1, keepdims=True)           # softmax over S (sublane groups of 8)
    context = jnp.sum(attn * enc3, axis=1)                   # (B, H)

    # ---- embedding gather as an exact one-hot MXU matmul (dropout = identity in eval mode) ----
    lane = jax.lax.broadcasted_iota(jnp.int32, (B, VP), 1)
    row = jax.lax.broadcasted_iota(jnp.int32, (B, VP), 0)
    onehot = jnp.zeros((B, VP), f32)
    for b in range(B):                       # B scalar-broadcast compares; no dynamic-index loads
        onehot = jnp.where((row == b) & (lane == tok_ref[b]), 1.0, onehot)
    # embedding already folded into the layer-0 gate table wrapper-side -> (B, 4H) directly
    emb_gates = jnp.dot(onehot, w_ref[EMB_GATE_OFF:EMB_GATE_OFF + VP, :],
                        preferred_element_type=f32)

    # ---- single-timestep multi-layer LSTM (gate order i, f, g, o); split matmuls, no concats ----
    top_h = None
    for l in range(L):
        if l == 0:
            x_gates = emb_gates + jnp.dot(
                context, w_ref[LSTM_IN_OFF[0]:LSTM_IN_OFF[0] + H, :],
                preferred_element_type=f32)
        else:
            # TODO(synk): inter-layer LSTM dropout omitted (eval mode => identity).
            x_gates = jnp.dot(top_h, w_ref[LSTM_IN_OFF[l]:LSTM_IN_OFF[l] + H, :],
                              preferred_element_type=f32)
        gates = (x_gates
                 + jnp.dot(state_ref[l], w_ref[LSTM_HH_OFF[l]:LSTM_HH_OFF[l] + H, :],
                           preferred_element_type=f32)
                 + w_ref[LSTM_B_OFF[l]:LSTM_B_OFF[l] + 1, :])                    # (B, 4H)
        sig = jax.nn.sigmoid(gates)          # one EUP pass over the full (B, 4H) vreg
        th = jnp.tanh(gates)                 # one EUP pass over the full (B, 4H) vreg
        # NOTE(v5e): the 3 lane-offset slices cost one XLU rotate each; a gate-major weight
        # layout would remove them if v5e rotate/store pressure ever matters.
        i_g = sig[:, 0 * H:1 * H]
        f_g = sig[:, 1 * H:2 * H]
        g_g = th[:, 2 * H:3 * H]
        o_g = sig[:, 3 * H:4 * H]
        c_new = f_g * state_ref[L + l] + i_g * g_g
        h_new = o_g * jnp.tanh(c_new)
        state_new_ref[l] = h_new             # hidden slot l
        state_new_ref[L + l] = c_new         # cell slot l
        top_h = h_new

    # ---- output projection: fc(cat(rnn_output, context)) as two lane-0-aligned matmuls ----
    w_fc_h = w_ref[W_FCH_OFF:W_FCH_OFF + H, :H]              # (H, H); lanes >= O are zero
    w_fc_c = w_ref[W_FCC_OFF:W_FCC_OFF + H, :H]
    b_fc = w_ref[B_FC_OFF:B_FC_OFF + 1, :H]
    out_full = (jnp.dot(top_h, w_fc_h, preferred_element_type=f32)
                + jnp.dot(context, w_fc_c, preferred_element_type=f32)
                + b_fc)                                       # (B, H)
    out_ref[...] = out_full[:, :O]


def pack_params(params):
    """Pack ALL weights into one contiguous, 8-row-aligned, 128-lane buffer (wrapper-side)."""
    hp = jax.lax.Precision.HIGHEST
    w = jnp.zeros((TOTAL_ROWS, G), jnp.float32)
    # embedding folded into the layer-0 input-gate table: row v = emb_table[v] @ W_ih_l0[:E]
    emb_gate_tbl = jnp.dot(params["emb_table"], params["w_ih"][0][:E, :], precision=hp)
    w = w.at[EMB_GATE_OFF:EMB_GATE_OFF + V, :].set(emb_gate_tbl)
    # layer 0: context part of W_ih, then W_hh
    w = w.at[LSTM_IN_OFF[0]:LSTM_IN_OFF[0] + H, :].set(params["w_ih"][0][E:E + H, :])
    w = w.at[LSTM_HH_OFF[0]:LSTM_HH_OFF[0] + H, :].set(params["w_hh"][0])
    # layers > 0: input is h from the layer below (only the first H rows of w_ih are real)
    for l in range(1, L):
        w = w.at[LSTM_IN_OFF[l]:LSTM_IN_OFF[l] + H, :].set(params["w_ih"][l][:H, :])
        w = w.at[LSTM_HH_OFF[l]:LSTM_HH_OFF[l] + H, :].set(params["w_hh"][l])
    for l in range(L):
        w = w.at[LSTM_B_OFF[l]:LSTM_B_OFF[l] + 1, :].set(params["b_lstm"][l])
    w = w.at[WH_ATT_OFF:WH_ATT_OFF + H, :H].set(params["wh_attn"])
    w = w.at[WE_ATT_OFF:WE_ATT_OFF + H, :H].set(params["we_attn"])
    w = w.at[B_ATT_OFF:B_ATT_OFF + 1, :H].set(params["b_attn"])
    w = w.at[V_ATT_OFF:V_ATT_OFF + 1, :H].set(params["v_attn"].T)
    w = w.at[W_FCH_OFF:W_FCH_OFF + H, :O].set(params["w_fc"][:H])
    w = w.at[W_FCC_OFF:W_FCC_OFF + H, :O].set(params["w_fc"][H:])
    w = w.at[B_FC_OFF:B_FC_OFF + 1, :O].set(params["b_fc"])
    return w


def prepare_encoder_outputs(enc_out):
    """(S, B, H) seq-major -> (B*S, H) batch-major. Done ONCE per source sequence (hoisted out
    of the decode loop) so in-kernel reshapes stay sublane-aligned (groups of S=8 rows)."""
    return jnp.transpose(enc_out, (1, 0, 2)).reshape(B * S, H)


@functools.partial(jax.jit, donate_argnums=(1,))
def decoder_attention_forward(tokens, state, enc_bm, w_packed):
    smem = pl.BlockSpec(memory_space=pltpu.MemorySpace.SMEM)
    vmem = pl.BlockSpec(memory_space=pltpu.MemorySpace.VMEM)
    out_shapes = (
        jax.ShapeDtypeStruct((B, O), jnp.float32),          # fc output
        jax.ShapeDtypeStruct((2 * L, B, H), jnp.float32),   # new [h_0..h_{L-1}, c_0..c_{L-1}]
    )
    return pl.pallas_call(
        decoder_attention_kernel,
        out_shape=out_shapes,
        in_specs=[smem, vmem, vmem, vmem],
        out_specs=(vmem, vmem),
        # true in-place state update: `state` is donated at the jit level AND aliased here,
        # so XLA does not insert a defensive copy and saves the extra HBM round trip.
        input_output_aliases={1: 1},
    )(tokens, state, enc_bm, w_packed)


def reference_forward(tokens, hidden, cell, enc_out, params):
    """Pure-JAX mirror of the PyTorch forward (for verification)."""
    emb = params["emb_table"][tokens]                       # (B, E)
    dec_h = hidden[-1]                                      # (B, H)
    h_proj = dec_h @ params["wh_attn"]
    e_proj = jnp.einsum("sbh,hk->sbk", enc_out, params["we_attn"])
    energy = jnp.tanh(e_proj + h_proj[None] + params["b_attn"][None])
    scores = jnp.einsum("sbh,hk->sbk", energy, params["v_attn"])[..., 0].T   # (B, S)
    attn = jax.nn.softmax(scores, axis=1)
    context = jnp.einsum("bs,sbh->bh", attn, enc_out)
    x = jnp.concatenate([emb, context], axis=1)
    h_out, c_out = [], []
    top_h = x
    for l in range(L):
        if l > 0:
            x = jnp.concatenate([top_h, jnp.zeros((B, E), jnp.float32)], axis=1)
        gates = x @ params["w_ih"][l] + hidden[l] @ params["w_hh"][l] + params["b_lstm"][l]
        i_g = jax.nn.sigmoid(gates[:, 0 * H:1 * H])
        f_g = jax.nn.sigmoid(gates[:, 1 * H:2 * H])
        g_g = jnp.tanh(gates[:, 2 * H:3 * H])
        o_g = jax.nn.sigmoid(gates[:, 3 * H:4 * H])
        c_new = f_g * cell[l] + i_g * g_g
        h_new = o_g * jnp.tanh(c_new)
        h_out.append(h_new)
        c_out.append(c_new)
        top_h = h_new
    fc_in = jnp.concatenate([top_h, context], axis=1)
    out = fc_in @ params["w_fc"] + params["b_fc"]
    return out, jnp.stack(h_out), jnp.stack(c_out)


def init_params(key):
    ks = jax.random.split(key, 12)
    sc = 0.1
    # zero-pad LSTM input weights for layers > 0 (their true input dim is H, not E+H)
    w_ih = jax.random.normal(ks[4], (L, E + H, 4 * H), jnp.float32) * sc
    row_mask = (jnp.arange(E + H)[None, :, None] < H).astype(jnp.float32)   # rows < H valid
    layer_mask = jnp.where(jnp.arange(L)[:, None, None] == 0, 1.0, row_mask)
    w_ih = w_ih * layer_mask
    return dict(
        emb_table=jax.random.normal(ks[0], (V, E), jnp.float32) * sc,
        wh_attn=jax.random.normal(ks[1], (H, H), jnp.float32) * sc,
        we_attn=jax.random.normal(ks[2], (H, H), jnp.float32) * sc,
        b_attn=jax.random.normal(ks[3], (1, H), jnp.float32) * sc,
        v_attn=jax.random.normal(ks[5], (H, 1), jnp.float32) * sc,
        w_ih=w_ih,
        w_hh=jax.random.normal(ks[6], (L, H, 4 * H), jnp.float32) * sc,
        b_lstm=jax.random.normal(ks[7], (L, 1, 4 * H), jnp.float32) * sc,
        w_fc=jax.random.normal(ks[8], (2 * H, O), jnp.float32) * sc,
        b_fc=jax.random.normal(ks[9], (1, O), jnp.float32) * sc,
    )


if __name__ == "__main__":
    key = jax.random.PRNGKey(0)
    kp, kt, kh, kc, ke = jax.random.split(key, 5)
    params = init_params(kp)

    tokens = jax.random.randint(kt, (B,), 0, V, dtype=jnp.int32)
    hidden = jax.random.normal(kh, (L, B, H), jnp.float32)
    cell = jax.random.normal(kc, (L, B, H), jnp.float32)
    enc_out = jax.random.normal(ke, (S, B, H), jnp.float32)

    # one-time prep (hoisted out of the decode loop in a real deployment)
    w_packed = pack_params(params)
    enc_bm = prepare_encoder_outputs(enc_out)
    # state is DONATED to the kernel call; hidden/cell stay valid (separate buffers).
    state = jnp.concatenate([hidden, cell], axis=0)          # (2L, B, H)

    out, state_new = jax.block_until_ready(
        decoder_attention_forward(tokens, state, enc_bm, w_packed))

    ref_out, ref_h, ref_c = reference_forward(tokens, hidden, cell, enc_out, params)
    np.testing.assert_allclose(np.asarray(out), np.asarray(ref_out), rtol=1e-5, atol=1e-5)
    np.testing.assert_allclose(np.asarray(state_new[:L]), np.asarray(ref_h), rtol=1e-5, atol=1e-5)
    np.testing.assert_allclose(np.asarray(state_new[L:]), np.asarray(ref_c), rtol=1e-5, atol=1e-5)

    print("KERNEL_OK")
</pallas_src>

<mosaic_0001>
module attributes {stable_mosaic.version = 11 : i64} {
  func.func @decoder_attention_kernel(%arg0: memref<4xi32, #tpu.memory_space<smem>>, %arg1: memref<4x4x32xf32, #tpu.memory_space<vmem>>, %arg2: memref<32x32xf32, #tpu.memory_space<vmem>>, %arg3: memref<360x128xf32, #tpu.memory_space<vmem>>, %arg4: memref<4x24xf32, #tpu.memory_space<vmem>>, %arg5: memref<4x4x32xf32, #tpu.memory_space<vmem>>) attributes {dimension_semantics = [], scalar_prefetch = 0 : i64, scratch_operands = 0 : i64, tpu.core_type = #tpu.core_type<tc>} {
    %c0 = arith.constant 0 : index
    %c0_0 = arith.constant 0 : index
    %0 = vector.load %arg2[%c0, %c0_0] : memref<32x32xf32, #tpu.memory_space<vmem>>, vector<32x32xf32>
    %1 = vector.shape_cast %0 : vector<32x32xf32> to vector<4x8x32xf32>
    %c1 = arith.constant 1 : index
    %c0_1 = arith.constant 0 : index
    %c0_2 = arith.constant 0 : index
    %2 = vector.load %arg1[%c1, %c0_1, %c0_2] : memref<4x4x32xf32, #tpu.memory_space<vmem>>, vector<1x4x32xf32>
    %3 = vector.shape_cast %2 : vector<1x4x32xf32> to vector<4x32xf32>
    %c240 = arith.constant 240 : index
    %c0_3 = arith.constant 0 : index
    %4 = vector.load %arg3[%c240, %c0_3] : memref<360x128xf32, #tpu.memory_space<vmem>>, vector<32x32xf32>
    %c208 = arith.constant 208 : index
    %c0_4 = arith.constant 0 : index
    %5 = vector.load %arg3[%c208, %c0_4] : memref<360x128xf32, #tpu.memory_space<vmem>>, vector<32x32xf32>
    %c272 = arith.constant 272 : index
    %c0_5 = arith.constant 0 : index
    %6 = vector.load %arg3[%c272, %c0_5] : memref<360x128xf32, #tpu.memory_space<vmem>>, vector<1x32xf32>
    %c280 = arith.constant 280 : index
    %c0_6 = arith.constant 0 : index
    %7 = vector.load %arg3[%c280, %c0_6] : memref<360x128xf32, #tpu.memory_space<vmem>>, vector<1x32xf32>
    %cst = arith.constant dense<0.000000e+00> : vector<32x32xf32>
    %8 = tpu.matmul %0, %4, %cst {dimension_numbers = #tpu.dot_dimension_numbers<[1], [0], [0], [1], [0, 0, 1, 1], [], []>} : vector<32x32xf32>, vector<32x32xf32>, vector<32x32xf32> -> vector<32x32xf32>
    %9 = vector.shape_cast %8 : vector<32x32xf32> to vector<4x8x32xf32>
    %cst_7 = arith.constant dense<0.000000e+00> : vector<4x32xf32>
    %10 = tpu.matmul %3, %5, %cst_7 {dimension_numbers = #tpu.dot_dimension_numbers<[1], [0], [0], [1], [0, 0, 1, 1], [], []>} : vector<4x32xf32>, vector<32x32xf32>, vector<4x32xf32> -> vector<4x32xf32>
    %11 = vector.broadcast %6 : vector<1x32xf32> to vector<4x32xf32>
    %12 = arith.addf %10, %11 : vector<4x32xf32>
    %13 = vector.shape_cast %12 : vector<4x32xf32> to vector<4x1x32xf32>
    %14 = vector.broadcast %13 : vector<4x1x32xf32> to vector<4x8x32xf32>
    %15 = arith.addf %9, %14 : vector<4x8x32xf32>
    %16 = math.tanh %15 : vector<4x8x32xf32>
    %17 = vector.shape_cast %7 : vector<1x32xf32> to vector<1x1x32xf32>
    %18 = vector.broadcast %17 : vector<1x1x32xf32> to vector<4x8x32xf32>
    %19 = arith.mulf %16, %18 : vector<4x8x32xf32>
    %cst_8 = arith.constant dense<0.000000e+00> : vector<4x8xf32>
    %20 = vector.multi_reduction <add>, %19, %cst_8 [2] : vector<4x8x32xf32> to vector<4x8xf32>
    %21 = vector.shape_cast %20 : vector<4x8xf32> to vector<4x8x1xf32>
    %cst_9 = arith.constant dense<0xFF800000> : vector<4x1xf32>
    %22 = vector.multi_reduction <maximumf>, %21, %cst_9 [1] : vector<4x8x1xf32> to vector<4x1xf32>
    %23 = vector.shape_cast %22 : vector<4x1xf32> to vector<4x1x1xf32>
    %24 = vector.broadcast %23 : vector<4x1x1xf32> to vector<4x8x1xf32>
    %25 = arith.subf %21, %24 : vector<4x8x1xf32>
    %26 = math.exp %25 : vector<4x8x1xf32>
    %cst_10 = arith.constant dense<0.000000e+00> : vector<4x1xf32>
    %27 = vector.multi_reduction <add>, %26, %cst_10 [1] : vector<4x8x1xf32> to vector<4x1xf32>
    %28 = vector.shape_cast %27 : vector<4x1xf32> to vector<4x1x1xf32>
    %29 = vector.broadcast %28 : vector<4x1x1xf32> to vector<4x8x1xf32>
    %30 = arith.divf %26, %29 : vector<4x8x1xf32>
    %31 = vector.broadcast %30 : vector<4x8x1xf32> to vector<4x8x32xf32>
    %32 = arith.mulf %31, %1 : vector<4x8x32xf32>
    %cst_11 = arith.constant dense<0.000000e+00> : vector<4x32xf32>
    %33 = vector.multi_reduction <add>, %32, %cst_11 [1] : vector<4x8x32xf32> to vector<4x32xf32>
    %34 = tpu.iota {dimensions = array<i32: 1>} : vector<4x64xi32>
    %35 = tpu.iota {dimensions = array<i32: 0>} : vector<4x64xi32>
    %cst_12 = arith.constant 0.000000e+00 : f32
    %36 = vector.broadcast %cst_12 : f32 to vector<4x64xf32>
    %c0_i32 = arith.constant 0 : i32
    %37 = vector.broadcast %c0_i32 : i32 to vector<4x64xi32>
    %38 = arith.cmpi eq, %35, %37 : vector<4x64xi32>
    %c0_13 = arith.constant 0 : index
    %39 = memref.load %arg0[%c0_13] : memref<4xi32, #tpu.memory_space<smem>>
    %40 = vector.broadcast %39 : i32 to vector<4x64xi32>
    %41 = arith.cmpi eq, %34, %40 : vector<4x64xi32>
    %42 = arith.andi %38, %41 : vector<4x64xi1>
    %cst_14 = arith.constant 1.000000e+00 : f32
    %43 = vector.broadcast %cst_14 : f32 to vector<4x64xf32>
    %44 = arith.select %42, %43, %36 : vector<4x64xi1>, vector<4x64xf32>
    %c1_i32 = arith.constant 1 : i32
    %45 = vector.broadcast %c1_i32 : i32 to vector<4x64xi32>
    %46 = arith.cmpi eq, %35, %45 : vector<4x64xi32>
    %c1_15 = arith.constant 1 : index
    %47 = memref.load %arg0[%c1_15] : memref<4xi32, #tpu.memory_space<smem>>
    %48 = vector.broadcast %47 : i32 to vector<4x64xi32>
    %49 = arith.cmpi eq, %34, %48 : vector<4x64xi32>
    %50 = arith.andi %46, %49 : vector<4x64xi1>
    %cst_16 = arith.constant 1.000000e+00 : f32
    %51 = vector.broadcast %cst_16 : f32 to vector<4x64xf32>
    %52 = arith.select %50, %51, %44 : vector<4x64xi1>, vector<4x64xf32>
    %c2_i32 = arith.constant 2 : i32
    %53 = vector.broadcast %c2_i32 : i32 to vector<4x64xi32>
    %54 = arith.cmpi eq, %35, %53 : vector<4x64xi32>
    %c2 = arith.constant 2 : index
    %55 = memref.load %arg0[%c2] : memref<4xi32, #tpu.memory_space<smem>>
    %56 = vector.broadcast %55 : i32 to vector<4x64xi32>
    %57 = arith.cmpi eq, %34, %56 : vector<4x64xi32>
    %58 = arith.andi %54, %57 : vector<4x64xi1>
    %cst_17 = arith.constant 1.000000e+00 : f32
    %59 = vector.broadcast %cst_17 : f32 to vector<4x64xf32>
    %60 = arith.select %58, %59, %52 : vector<4x64xi1>, vector<4x64xf32>
    %c3_i32 = arith.constant 3 : i32
    %61 = vector.broadcast %c3_i32 : i32 to vector<4x64xi32>
    %62 = arith.cmpi eq, %35, %61 : vector<4x64xi32>
    %c3 = arith.constant 3 : index
    %63 = memref.load %arg0[%c3] : memref<4xi32, #tpu.memory_space<smem>>
    %64 = vector.broadcast %63 : i32 to vector<4x64xi32>
    %65 = arith.cmpi eq, %34, %64 : vector<4x64xi32>
    %66 = arith.andi %62, %65 : vector<4x64xi1>
    %cst_18 = arith.constant 1.000000e+00 : f32
    %67 = vector.broadcast %cst_18 : f32 to vector<4x64xf32>
    %68 = arith.select %66, %67, %60 : vector<4x64xi1>, vector<4x64xf32>
    %c0_19 = arith.constant 0 : index
    %c0_20 = arith.constant 0 : index
    %69 = vector.load %arg3[%c0_19, %c0_20] : memref<360x128xf32, #tpu.memory_space<vmem>>, vector<64x128xf32>
    %cst_21 = arith.constant dense<0.000000e+00> : vector<4x128xf32>
    %70 = tpu.matmul %68, %69, %cst_21 {dimension_numbers = #tpu.dot_dimension_numbers<[1], [0], [0], [1], [0, 0, 1, 1], [], []>} : vector<4x64xf32>, vector<64x128xf32>, vector<4x128xf32> -> vector<4x128xf32>
    %c64 = arith.constant 64 : index
    %c0_22 = arith.constant 0 : index
    %71 = vector.load %arg3[%c64, %c0_22] : memref<360x128xf32, #tpu.memory_space<vmem>>, vector<32x128xf32>
    %cst_23 = arith.constant dense<0.000000e+00> : vector<4x128xf32>
    %72 = tpu.matmul %33, %71, %cst_23 {dimension_numbers = #tpu.dot_dimension_numbers<[1], [0], [0], [1], [0, 0, 1, 1], [], []>} : vector<4x32xf32>, vector<32x128xf32>, vector<4x128xf32> -> vector<4x128xf32>
    %73 = arith.addf %70, %72 : vector<4x128xf32>
    %c0_24 = arith.constant 0 : index
    %c0_25 = arith.constant 0 : index
    %c0_26 = arith.constant 0 : index
    %74 = vector.load %arg1[%c0_24, %c0_25, %c0_26] : memref<4x4x32xf32, #tpu.memory_space<vmem>>, vector<1x4x32xf32>
    %75 = vector.shape_cast %74 : vector<1x4x32xf32> to vector<4x32xf32>
    %c96 = arith.constant 96 : index
    %c0_27 = arith.constant 0 : index
    %76 = vector.load %arg3[%c96, %c0_27] : memref<360x128xf32, #tpu.memory_space<vmem>>, vector<32x128xf32>
    %cst_28 = arith.constant dense<0.000000e+00> : vector<4x128xf32>
    %77 = tpu.matmul %75, %76, %cst_28 {dimension_numbers = #tpu.dot_dimension_numbers<[1], [0], [0], [1], [0, 0, 1, 1], [], []>} : vector<4x32xf32>, vector<32x128xf32>, vector<4x128xf32> -> vector<4x128xf32>
    %78 = arith.addf %73, %77 : vector<4x128xf32>
    %c192 = arith.constant 192 : index
    %c0_29 = arith.constant 0 : index
    %79 = vector.load %arg3[%c192, %c0_29] : memref<360x128xf32, #tpu.memory_space<vmem>>, vector<1x128xf32>
    %80 = vector.broadcast %79 : vector<1x128xf32> to vector<4x128xf32>
    %81 = arith.addf %78, %80 : vector<4x128xf32>
    %82 = arith.negf %81 : vector<4x128xf32>
    %83 = math.exp %82 : vector<4x128xf32>
    %cst_30 = arith.constant 1.000000e+00 : f32
    %84 = vector.broadcast %cst_30 : f32 to vector<4x128xf32>
    %85 = arith.addf %84, %83 : vector<4x128xf32>
    %86 = arith.divf %84, %85 : vector<4x128xf32>
    %87 = math.tanh %81 : vector<4x128xf32>
    %88 = vector.extract_strided_slice %86 {offsets = [0, 0], sizes = [4, 32], strides = [1, 1]} : vector<4x128xf32> to vector<4x32xf32>
    %89 = vector.extract_strided_slice %86 {offsets = [0, 32], sizes = [4, 32], strides = [1, 1]} : vector<4x128xf32> to vector<4x32xf32>
    %90 = vector.extract_strided_slice %87 {offsets = [0, 64], sizes = [4, 32], strides = [1, 1]} : vector<4x128xf32> to vector<4x32xf32>
    %91 = vector.extract_strided_slice %86 {offsets = [0, 96], sizes = [4, 32], strides = [1, 1]} : vector<4x128xf32> to vector<4x32xf32>
    %c2_31 = arith.constant 2 : index
    %c0_32 = arith.constant 0 : index
    %c0_33 = arith.constant 0 : index
    %92 = vector.load %arg1[%c2_31, %c0_32, %c0_33] : memref<4x4x32xf32, #tpu.memory_space<vmem>>, vector<1x4x32xf32>
    %93 = vector.shape_cast %92 : vector<1x4x32xf32> to vector<4x32xf32>
    %94 = arith.mulf %89, %93 : vector<4x32xf32>
    %95 = arith.mulf %88, %90 : vector<4x32xf32>
    %96 = arith.addf %94, %95 : vector<4x32xf32>
    %97 = math.tanh %96 : vector<4x32xf32>
    %98 = arith.mulf %91, %97 : vector<4x32xf32>
    %c0_34 = arith.constant 0 : index
    %c0_35 = arith.constant 0 : index
    %c0_36 = arith.constant 0 : index
    %99 = vector.load %arg5[%c0_34, %c0_35, %c0_36] : memref<4x4x32xf32, #tpu.memory_space<vmem>>, vector<1x4x32xf32>
    %100 = vector.shape_cast %99 : vector<1x4x32xf32> to vector<4x32xf32>
    %101 = vector.shape_cast %98 : vector<4x32xf32> to vector<1x4x32xf32>
    tpu.vector_store %arg5[%c0_34, %c0_35, %c0_36], %101 {strides = array<i32>} : memref<4x4x32xf32, #tpu.memory_space<vmem>>, vector<1x4x32xf32>,
    %c2_37 = arith.constant 2 : index
    %c0_38 = arith.constant 0 : index
    %c0_39 = arith.constant 0 : index
    %102 = vector.load %arg5[%c2_37, %c0_38, %c0_39] : memref<4x4x32xf32, #tpu.memory_space<vmem>>, vector<1x4x32xf32>
    %103 = vector.shape_cast %102 : vector<1x4x32xf32> to vector<4x32xf32>
    %104 = vector.shape_cast %96 : vector<4x32xf32> to vector<1x4x32xf32>
    tpu.vector_store %arg5[%c2_37, %c0_38, %c0_39], %104 {strides = array<i32>} : memref<4x4x32xf32, #tpu.memory_space<vmem>>, vector<1x4x32xf32>,
    %c128 = arith.constant 128 : index
    %c0_40 = arith.constant 0 : index
    %105 = vector.load %arg3[%c128, %c0_40] : memref<360x128xf32, #tpu.memory_space<vmem>>, vector<32x128xf32>
    %cst_41 = arith.constant dense<0.000000e+00> : vector<4x128xf32>
    %106 = tpu.matmul %98, %105, %cst_41 {dimension_numbers = #tpu.dot_dimension_numbers<[1], [0], [0], [1], [0, 0, 1, 1], [], []>} : vector<4x32xf32>, vector<32x128xf32>, vector<4x128xf32> -> vector<4x128xf32>
    %c1_42 = arith.constant 1 : index
    %c0_43 = arith.constant 0 : index
    %c0_44 = arith.constant 0 : index
    %107 = vector.load %arg1[%c1_42, %c0_43, %c0_44] : memref<4x4x32xf32, #tpu.memory_space<vmem>>, vector<1x4x32xf32>
    %108 = vector.shape_cast %107 : vector<1x4x32xf32> to vector<4x32xf32>
    %c160 = arith.constant 160 : index
    %c0_45 = arith.constant 0 : index
    %109 = vector.load %arg3[%c160, %c0_45] : memref<360x128xf32, #tpu.memory_space<vmem>>, vector<32x128xf32>
    %cst_46 = arith.constant dense<0.000000e+00> : vector<4x128xf32>
    %110 = tpu.matmul %108, %109, %cst_46 {dimension_numbers = #tpu.dot_dimension_numbers<[1], [0], [0], [1], [0, 0, 1, 1], [], []>} : vector<4x32xf32>, vector<32x128xf32>, vector<4x128xf32> -> vector<4x128xf32>
    %111 = arith.addf %106, %110 : vector<4x128xf32>
    %c200 = arith.constant 200 : index
    %c0_47 = arith.constant 0 : index
    %112 = vector.load %arg3[%c200, %c0_47] : memref<360x128xf32, #tpu.memory_space<vmem>>, vector<1x128xf32>
    %113 = vector.broadcast %112 : vector<1x128xf32> to vector<4x128xf32>
    %114 = arith.addf %111, %113 : vector<4x128xf32>
    %115 = arith.negf %114 : vector<4x128xf32>
    %116 = math.exp %115 : vector<4x128xf32>
    %cst_48 = arith.constant 1.000000e+00 : f32
    %117 = vector.broadcast %cst_48 : f32 to vector<4x128xf32>
    %118 = arith.addf %117, %116 : vector<4x128xf32>
    %119 = arith.divf %117, %118 : vector<4x128xf32>
    %120 = math.tanh %114 : vector<4x128xf32>
    %121 = vector.extract_strided_slice %119 {offsets = [0, 0], sizes = [4, 32], strides = [1, 1]} : vector<4x128xf32> to vector<4x32xf32>
    %122 = vector.extract_strided_slice %119 {offsets = [0, 32], sizes = [4, 32], strides = [1, 1]} : vector<4x128xf32> to vector<4x32xf32>
    %123 = vector.extract_strided_slice %120 {offsets = [0, 64], sizes = [4, 32], strides = [1, 1]} : vector<4x128xf32> to vector<4x32xf32>
    %124 = vector.extract_strided_slice %119 {offsets = [0, 96], sizes = [4, 32], strides = [1, 1]} : vector<4x128xf32> to vector<4x32xf32>
    %c3_49 = arith.constant 3 : index
    %c0_50 = arith.constant 0 : index
    %c0_51 = arith.constant 0 : index
    %125 = vector.load %arg1[%c3_49, %c0_50, %c0_51] : memref<4x4x32xf32, #tpu.memory_space<vmem>>, vector<1x4x32xf32>
    %126 = vector.shape_cast %125 : vector<1x4x32xf32> to vector<4x32xf32>
    %127 = arith.mulf %122, %126 : vector<4x32xf32>
    %128 = arith.mulf %121, %123 : vector<4x32xf32>
    %129 = arith.addf %127, %128 : vector<4x32xf32>
    %130 = math.tanh %129 : vector<4x32xf32>
    %131 = arith.mulf %124, %130 : vector<4x32xf32>
    %c1_52 = arith.constant 1 : index
    %c0_53 = arith.constant 0 : index
    %c0_54 = arith.constant 0 : index
    %132 = vector.load %arg5[%c1_52, %c0_53, %c0_54] : memref<4x4x32xf32, #tpu.memory_space<vmem>>, vector<1x4x32xf32>
    %133 = vector.shape_cast %132 : vector<1x4x32xf32> to vector<4x32xf32>
    %134 = vector.shape_cast %131 : vector<4x32xf32> to vector<1x4x32xf32>
    tpu.vector_store %arg5[%c1_52, %c0_53, %c0_54], %134 {strides = array<i32>} : memref<4x4x32xf32, #tpu.memory_space<vmem>>, vector<1x4x32xf32>,
    %c3_55 = arith.constant 3 : index
    %c0_56 = arith.constant 0 : index
    %c0_57 = arith.constant 0 : index
    %135 = vector.load %arg5[%c3_55, %c0_56, %c0_57] : memref<4x4x32xf32, #tpu.memory_space<vmem>>, vector<1x4x32xf32>
    %136 = vector.shape_cast %135 : vector<1x4x32xf32> to vector<4x32xf32>
    %137 = vector.shape_cast %129 : vector<4x32xf32> to vector<1x4x32xf32>
    tpu.vector_store %arg5[%c3_55, %c0_56, %c0_57], %137 {strides = array<i32>} : memref<4x4x32xf32, #tpu.memory_space<vmem>>, vector<1x4x32xf32>,
    %c288 = arith.constant 288 : index
    %c0_58 = arith.constant 0 : index
    %138 = vector.load %arg3[%c288, %c0_58] : memref<360x128xf32, #tpu.memory_space<vmem>>, vector<32x32xf32>
    %c320 = arith.constant 320 : index
    %c0_59 = arith.constant 0 : index
    %139 = vector.load %arg3[%c320, %c0_59] : memref<360x128xf32, #tpu.memory_space<vmem>>, vector<32x32xf32>
    %c352 = arith.constant 352 : index
    %c0_60 = arith.constant 0 : index
    %140 = vector.load %arg3[%c352, %c0_60] : memref<360x128xf32, #tpu.memory_space<vmem>>, vector<1x32xf32>
    %cst_61 = arith.constant dense<0.000000e+00> : vector<4x32xf32>
    %141 = tpu.matmul %131, %138, %cst_61 {dimension_numbers = #tpu.dot_dimension_numbers<[1], [0], [0], [1], [0, 0, 1, 1], [], []>} : vector<4x32xf32>, vector<32x32xf32>, vector<4x32xf32> -> vector<4x32xf32>
    %cst_62 = arith.constant dense<0.000000e+00> : vector<4x32xf32>
    %142 = tpu.matmul %33, %139, %cst_62 {dimension_numbers = #tpu.dot_dimension_numbers<[1], [0], [0], [1], [0, 0, 1, 1], [], []>} : vector<4x32xf32>, vector<32x32xf32>, vector<4x32xf32> -> vector<4x32xf32>
    %143 = arith.addf %141, %142 : vector<4x32xf32>
    %144 = vector.broadcast %140 : vector<1x32xf32> to vector<4x32xf32>
    %145 = arith.addf %143, %144 : vector<4x32xf32>
    %146 = vector.extract_strided_slice %145 {offsets = [0, 0], sizes = [4, 24], strides = [1, 1]} : vector<4x32xf32> to vector<4x24xf32>
    %c0_63 = arith.constant 0 : index
    %c0_64 = arith.constant 0 : index
    %147 = vector.load %arg4[%c0_63, %c0_64] : memref<4x24xf32, #tpu.memory_space<vmem>>, vector<4x24xf32>
    tpu.vector_store %arg4[%c0_63, %c0_64], %146 {strides = array<i32>} : memref<4x24xf32, #tpu.memory_space<vmem>>, vector<4x24xf32>,
    return
  }
}

</mosaic_0001>

<llo_original>
// kernel: decoder_attention_forward.1
$region0: #{decoder_attention_forward.1}
  #allocation0 [shape = 'u32[]', space=smem, size = 0x4, offset = 0x4, fixed_abs, tag = 'smem constant byte address 0x4 - core index']
  #allocation1 [shape = 'u32[144,128]{1,0:T(1,128)}', space=vmem, size = 0x12000, scoped, tag = 'internal scratch']
  %s0 = inlined_call_operand.hbm [shape: s32[4], index: 0, kind: input, shape index: {}]
  %s1 = inlined_call_operand.hbm [shape: f32[4,4,32], index: 1, kind: input, shape index: {}, may-alias: {1,5}]
  %s2 = inlined_call_operand.hbm [shape: f32[32,32], index: 2, kind: input, shape index: {}]
  %s3 = inlined_call_operand.hbm [shape: f32[360,128], index: 3, kind: input, shape index: {}]
  %s4 = inlined_call_operand.hbm [shape: f32[4,24], index: 4, kind: output, shape index: {0}]
  %s5 = inlined_call_operand.hbm [shape: f32[4,4,32], index: 5, kind: output, shape index: {1}, may-alias: {1,5}]
  %6 = xla_tuple %s4, %s5
  %s7 = sld [smem:[#allocation0]]
  $region50: #{decoder_attention_forward.1} parent=0
    _
  %s9 = ssub.s32 1, %s7
  %s10 = scalar_select 0, %s9, %s7
  $region1: #{decoder_attention_forward.1} parent=0
    #allocation2 [shape = 'u8[512]{0}', space=smem, size = 0x200, scoped, tag = 'input window, operand 0, single buffered']
    #allocation3 [shape = 's32[1]{0}', space=sflag, size = 0x4, scoped, tag = 'scoped memory for decoder_attention_forward.1']
    #allocation4 [shape = 's32[1]{0}', space=sflag, size = 0x4, scoped, tag = 'scoped memory for decoder_attention_forward.1']
    #allocation5 [shape = 's32[1]{0}', space=sflag, size = 0x4, scoped, tag = 'scoped memory for decoder_attention_forward.1']
    #allocation6 [shape = 'u8[8192]{0}', space=vmem, size = 0x2000, scoped, tag = 'input window, operand 1, single buffered']
    #allocation7 [shape = 'u8[16384]{0}', space=vmem, size = 0x4000, scoped, tag = 'input window, operand 2, single buffered']
    #allocation8 [shape = 's32[1]{0}', space=sflag, size = 0x4, scoped, tag = 'scoped memory for decoder_attention_forward.1']
    #allocation9 [shape = 'u8[184320]{0}', space=vmem, size = 0x2d000, scoped, tag = 'input window, operand 3, single buffered']
    #allocation10 [shape = 'u8[2048]{0}', space=vmem, size = 0x800, scoped, tag = 'output window, operand 0, single buffered']
    #allocation11 [shape = 'u8[8192]{0}', space=vmem, size = 0x2000, scoped, tag = 'output window, operand 1, single buffered']
    #allocation12 [shape = 's32[1]{0}', space=sflag, size = 0x4, scoped, tag = 'scoped memory for decoder_attention_forward.1']
    %11 = vsyncpa [#allocation5], 0
    %12 = vsyncpa [#allocation3], 0
    %13 = vsyncpa [#allocation8], 0
    %14 = vsyncpa [#allocation4], 0
    %15 = vsyncpa [#allocation12], 0
    // Predicated region
    $region2: #{decoder_attention_forward.1} parent=1 // pred_check
      _
    $region3: #{decoder_attention_forward.1} parent=1 // pred_check_branch
      %17 = sbr.rel (0) target = $region5
    $region4: #{decoder_attention_forward.1} parent=1 // pred_region
      %s19 = ssub.s32 16, 16
      %20 = vsyncadd [#allocation5], %s19
      %23 = dma.hbm_to_smem %s0, 16, [#allocation2], [#allocation5]
    $region5: #{decoder_attention_forward.1} parent=1 // pred_fallthru
      _
    // Predicated region
    $region6: #{decoder_attention_forward.1} parent=1 // pred_check
      _
    $region7: #{decoder_attention_forward.1} parent=1 // pred_check_branch
      %25 = sbr.rel (0) target = $region9
    $region8: #{decoder_attention_forward.1} parent=1 // pred_region
      %s27 = ssub.s32 256, 256
      %28 = vsyncadd [#allocation3], %s27
      %s29 = sshll.u32 [#allocation6], 4
      %s30 = int_to_ptr.vmem [resolvable:$true] %s29
      %35 = dma.hbm_to_vmem [thread:$0]  %s1, 256, %s30, [#allocation3], 64, 64, 4
    $region9: #{decoder_attention_forward.1} parent=1 // pred_fallthru
      _
    // Predicated region
    $region10: #{decoder_attention_forward.1} parent=1 // pred_check
      _
    $region11: #{decoder_attention_forward.1} parent=1 // pred_check_branch
      %37 = sbr.rel (0) target = $region13
    $region12: #{decoder_attention_forward.1} parent=1 // pred_region
      %s39 = ssub.s32 512, 512
      %40 = vsyncadd [#allocation8], %s39
      %s41 = sshll.u32 [#allocation7], 4
      %s42 = int_to_ptr.vmem [resolvable:$true] %s41
      %47 = dma.hbm_to_vmem [thread:$0]  %s2, 512, %s42, [#allocation8], 128, 128, 8
    $region13: #{decoder_attention_forward.1} parent=1 // pred_fallthru
      _
    // Predicated region
    $region14: #{decoder_attention_forward.1} parent=1 // pred_check
      _
    $region15: #{decoder_attention_forward.1} parent=1 // pred_check_branch
      %49 = sbr.rel (0) target = $region17
    $region16: #{decoder_attention_forward.1} parent=1 // pred_region
      %s51 = ssub.s32 5760, 5760
      %52 = vsyncadd [#allocation8], %s51
      %s53 = sshll.u32 [#allocation9], 4
      %s54 = int_to_ptr.vmem [resolvable:$true] %s53
      %59 = dma.hbm_to_vmem [thread:$0]  %s3, 5760, %s54, [#allocation8], 128, 128, 8
    $region17: #{decoder_attention_forward.1} parent=1 // pred_fallthru
      _
    // Predicated region
    $region18: #{decoder_attention_forward.1} parent=1 // pred_check
      _
    $region19: #{decoder_attention_forward.1} parent=1 // pred_check_branch
      %61 = sbr.rel (0) target = $region21
    $region20: #{decoder_attention_forward.1} parent=1 // pred_region
      %62 = dma.done [#allocation5], 16
    $region21: #{decoder_attention_forward.1} parent=1 // pred_fallthru
      _
    // Predicated region
    $region22: #{decoder_attention_forward.1} parent=1 // pred_check
      _
    $region23: #{decoder_attention_forward.1} parent=1 // pred_check_branch
      %64 = sbr.rel (0) target = $region25
    $region24: #{decoder_attention_forward.1} parent=1 // pred_region
      %65 = dma.done [#allocation3], 256
    $region25: #{decoder_attention_forward.1} parent=1 // pred_fallthru
      _
    // Predicated region
    $region26: #{decoder_attention_forward.1} parent=1 // pred_check
      _
    $region27: #{decoder_attention_forward.1} parent=1 // pred_check_branch
      %67 = sbr.rel (0) target = $region29
    $region28: #{decoder_attention_forward.1} parent=1 // pred_region
      %68 = dma.done [#allocation8], 512
    $region29: #{decoder_attention_forward.1} parent=1 // pred_fallthru
      _
    // Predicated region
    $region30: #{decoder_attention_forward.1} parent=1 // pred_check
      _
    $region31: #{decoder_attention_forward.1} parent=1 // pred_check_branch
      %70 = sbr.rel (0) target = $region33
    $region32: #{decoder_attention_forward.1} parent=1 // pred_region
      %71 = dma.done [#allocation8], 5760
    $region33: #{decoder_attention_forward.1} parent=1 // pred_fallthru
      _
    %72 = sfence
    %v73 = vld [vmem:[#allocation7] sm:$0xff]
    %v74 = vld [vmem:[#allocation7 + $0x8] sm:$0xff]
    %v75 = vld [vmem:[#allocation7 + $0x10] sm:$0xff]
    %v76 = vld [vmem:[#allocation7 + $0x18] sm:$0xff]
    %s77 = scalar_lea.vmem [#allocation6], 4
    %v78 = vld [vmem:[%s77] sm:$0xf]
    %v79 = vld [vmem:[#allocation9 + $0xf0] sm:$0xff]
    %v80 = vld [vmem:[#allocation9 + $0xf8] sm:$0xff]
    %v81 = vld [vmem:[#allocation9 + $0x100] sm:$0xff]
    %v82 = vld [vmem:[#allocation9 + $0x108] sm:$0xff]
    %v83 = vld [vmem:[#allocation9 + $0xd0] sm:$0xff]
    %v84 = vld [vmem:[#allocation9 + $0xd8] sm:$0xff]
    %v85 = vld [vmem:[#allocation9 + $0xe0] sm:$0xff]
    %v86 = vld [vmem:[#allocation9 + $0xe8] sm:$0xff]
    %v87 = vld [vmem:[#allocation9 + $0x110] sm:$0x1]
    %v88 = vld [vmem:[#allocation9 + $0x118] sm:$0x1]
    %vm89 = vcmask 261120
    %v91 = vsel %vm89, %v73, 0
    %v94 = vsel %vm89, %v74, 0
    %v97 = vsel %vm89, %v75, 0
    %v100 = vsel %vm89, %v76, 0
    %102 = vmatprep.subr.mxu0 0.0
    %103 = vmatpush1.msra.mxu0 0.0
    %104 = vmatprep.subr.mxu0 0.0
    %105 = vmatpush1.msra.mxu0 0.0
    %106 = vmatprep.subr.mxu0 0.0
    %107 = vmatpush1.msra.mxu0 0.0
    %108 = vmatprep.subr.mxu0 0.0
    %109 = vmatpush1.msra.mxu0 0.0
    %110 = vmatprep.subr.mxu0 0.0
    %111 = vmatpush1.msra.mxu0 0.0
    %112 = vmatprep.subr.mxu0 0.0
    %113 = vmatpush1.msra.mxu0 0.0
    %114 = vmatprep.subr.mxu0 0.0
    %115 = vmatpush1.msra.mxu0 0.0
    %116 = vmatprep.subr.mxu0 0.0
    %117 = vmatpush1.msra.mxu0 0.0
    %118 = vmatprep.subr.mxu0 0.0
    %119 = vmatpush1.msra.mxu0 0.0
    %120 = vmatprep.subr.mxu0 0.0
    %121 = vmatpush1.msra.mxu0 0.0
    %122 = vmatprep.subr.mxu0 0.0
    %123 = vmatpush1.msra.mxu0 0.0
    %124 = vmatprep.subr.mxu0 0.0
    %125 = vmatpush1.msra.mxu0 0.0
    %126 = vmatprep.subr.mxu0 0.0
    %127 = vmatpush1.msra.mxu0 %v82
    %128 = vmatprep.subr.mxu0 0.0
    %129 = vmatpush1.msra.mxu0 %v81
    %130 = vmatprep.subr.mxu0 0.0
    %131 = vmatpush1.msra.mxu0 %v80
    %132 = vmatprep.subr.mxu0 0.0
    %133 = vmatpush1.msra.mxu0 %v79
    %134 = vmatprep.subr.mxu0 0.0
    %135 = vmatpush2.msra.mxu0 0.0
    %136 = vmatprep.subr.mxu0 0.0
    %137 = vmatpush2.msra.mxu0 0.0
    %138 = vmatprep.subr.mxu0 0.0
    %139 = vmatpush2.msra.mxu0 0.0
    %140 = vmatprep.subr.mxu0 0.0
    %141 = vmatpush2.msra.mxu0 0.0
    %142 = vmatprep.subr.mxu0 0.0
    %143 = vmatpush2.msra.mxu0 0.0
    %144 = vmatprep.subr.mxu0 0.0
    %145 = vmatpush2.msra.mxu0 0.0
    %146 = vmatprep.subr.mxu0 0.0
    %147 = vmatpush2.msra.mxu0 0.0
    %148 = vmatprep.subr.mxu0 0.0
    %149 = vmatpush2.msra.mxu0 0.0
    %150 = vmatprep.subr.mxu0 0.0
    %151 = vmatpush2.msra.mxu0 0.0
    %152 = vmatprep.subr.mxu0 0.0
    %153 = vmatpush2.msra.mxu0 0.0
    %154 = vmatprep.subr.mxu0 0.0
    %155 = vmatpush2.msra.mxu0 0.0
    %156 = vmatprep.subr.mxu0 0.0
    %157 = vmatpush2.msra.mxu0 0.0
    %158 = vmatprep.subr.mxu0 0.0
    %159 = vmatpush2.msra.mxu0 0.0
    %160 = vmatprep.subr.mxu0 0.0
    %161 = vmatpush2.msra.mxu0 0.0
    %162 = vmatprep.subr.mxu0 0.0
    %163 = vmatpush2.msra.mxu0 0.0
    %164 = vmatprep.subr.mxu0 0.0
    %165 = vmatpush2.msra.mxu0 0.0
    %166 = vmatprep.mubr.f32.mxu0 0.0
    %167 = vmatmul.mubr.f32.gmra.mxu0 %v91
    %v168 = vpop.f32.mrf.mxu0
    %v169 = vadd.f32 0.0, %v168
    %v170 = vpop.f32.mrf.mxu0
    %171 = vmatprep.mubr.f32.mxu0 0.0
    %172 = vmatmul.mubr.f32.gmra.mxu0 %v94
    %v173 = vpop.f32.mrf.mxu0
    %v174 = vadd.f32 0.0, %v173
    %v175 = vpop.f32.mrf.mxu0
    %176 = vmatprep.mubr.f32.mxu0 0.0
    %177 = vmatmul.mubr.f32.gmra.mxu0 %v97
    %v178 = vpop.f32.mrf.mxu0
    %v179 = vadd.f32 0.0, %v178
    %v180 = vpop.f32.mrf.mxu0
    %181 = vmatprep.mubr.f32.mxu0 0.0
    %182 = vmatmul.mubr.f32.gmra.mxu0 %v100
    %v183 = vpop.f32.mrf.mxu0
    %v184 = vadd.f32 0.0, %v183
    %v185 = vpop.f32.mrf.mxu0
    %186 = vdwg.mxu0
    %v187 = vlaneseq
    %v188 = vshrl.u32 %v187, 7
    %v189 = vsub.s32 0, %v188
    %v190 = vrot.slane %v87, %v189
    %v192 = vsel %vm89, %v78, 0
    %194 = vmatprep.subr.mxu0 0.0
    %195 = vmatpush1.msra.mxu0 0.0
    %196 = vmatprep.subr.mxu0 0.0
    %197 = vmatpush1.msra.mxu0 0.0
    %198 = vmatprep.subr.mxu0 0.0
    %199 = vmatpush1.msra.mxu0 0.0
    %200 = vmatprep.subr.mxu0 0.0
    %201 = vmatpush1.msra.mxu0 0.0
    %202 = vmatprep.subr.mxu0 0.0
    %203 = vmatpush1.msra.mxu0 0.0
    %204 = vmatprep.subr.mxu0 0.0
    %205 = vmatpush1.msra.mxu0 0.0
    %206 = vmatprep.subr.mxu0 0.0
    %207 = vmatpush1.msra.mxu0 0.0
    %208 = vmatprep.subr.mxu0 0.0
    %209 = vmatpush1.msra.mxu0 0.0
    %210 = vmatprep.subr.mxu0 0.0
    %211 = vmatpush1.msra.mxu0 0.0
    %212 = vmatprep.subr.mxu0 0.0
    %213 = vmatpush1.msra.mxu0 0.0
    %214 = vmatprep.subr.mxu0 0.0
    %215 = vmatpush1.msra.mxu0 0.0
    %216 = vmatprep.subr.mxu0 0.0
    %217 = vmatpush1.msra.mxu0 0.0
    %218 = vmatprep.subr.mxu0 0.0
    %219 = vmatpush1.msra.mxu0 %v86
    %220 = vmatprep.subr.mxu0 0.0
    %221 = vmatpush1.msra.mxu0 %v85
    %222 = vmatprep.subr.mxu0 0.0
    %223 = vmatpush1.msra.mxu0 %v84
    %224 = vmatprep.subr.mxu0 0.0
    %225 = vmatpush1.msra.mxu0 %v83
    %226 = vmatprep.subr.mxu0 0.0
    %227 = vmatpush2.msra.mxu0 0.0
    %228 = vmatprep.subr.mxu0 0.0
    %229 = vmatpush2.msra.mxu0 0.0
    %230 = vmatprep.subr.mxu0 0.0
    %231 = vmatpush2.msra.mxu0 0.0
    %232 = vmatprep.subr.mxu0 0.0
    %233 = vmatpush2.msra.mxu0 0.0
    %234 = vmatprep.subr.mxu0 0.0
    %235 = vmatpush2.msra.mxu0 0.0
    %236 = vmatprep.subr.mxu0 0.0
    %237 = vmatpush2.msra.mxu0 0.0
    %238 = vmatprep.subr.mxu0 0.0
    %239 = vmatpush2.msra.mxu0 0.0
    %240 = vmatprep.subr.mxu0 0.0
    %241 = vmatpush2.msra.mxu0 0.0
    %242 = vmatprep.subr.mxu0 0.0
    %243 = vmatpush2.msra.mxu0 0.0
    %244 = vmatprep.subr.mxu0 0.0
    %245 = vmatpush2.msra.mxu0 0.0
    %246 = vmatprep.subr.mxu0 0.0
    %247 = vmatpush2.msra.mxu0 0.0
    %248 = vmatprep.subr.mxu0 0.0
    %249 = vmatpush2.msra.mxu0 0.0
    %250 = vmatprep.subr.mxu0 0.0
    %251 = vmatpush2.msra.mxu0 0.0
    %252 = vmatprep.subr.mxu0 0.0
    %253 = vmatpush2.msra.mxu0 0.0
    %254 = vmatprep.subr.mxu0 0.0
    %255 = vmatpush2.msra.mxu0 0.0
    %256 = vmatprep.subr.mxu0 0.0
    %257 = vmatpush2.msra.mxu0 0.0
    %258 = vmatprep.mubr.f32.mxu0 0.0
    %259 = vmatmul.mubr.f32.gmra.mxu0 %v192
    %v260 = vpop.f32.mrf.mxu0
    %v261 = vadd.f32 %v190, %v260
    %v262 = vpop.f32.mrf.mxu0
    %263 = vdwg.mxu0
    %v266 = vunpack.c.l.s4 1966171168
    %v267 = vunpack.c.0.s8 %v266
    %v268 = vlaneseq
    %v269 = vshrl.u32 %v268, 7
    %v270 = vsub.s32 %v267, %v269
    %v271 = vrot.slane %v261, %v270
    %v272 = vcombine.high %v271, %v271
    %v274 = vunpack.c.l.s4 1966171168
    %v275 = vunpack.c.0.s8 %v274
    %v276 = vlaneseq
    %v277 = vshrl.u32 %v276, 7
    %v278 = vsub.s32 %v275, %v277
    %v279 = vrot.slane %v271, %v278
    %v281 = vunpack.c.l.s4 1966171168
    %v282 = vunpack.c.0.s8 %v281
    %v283 = vlaneseq
    %v284 = vshrl.u32 %v283, 7
    %v285 = vsub.s32 %v282, %v284
    %v286 = vrot.slane %v272, %v285
    %v287 = vcombine.high %v279, %v279
    %v288 = vcombine.high %v286, %v286
    %v289 = vlaneseq
    %v290 = vshrl.u32 %v289, 7
    %v291 = vsub.s32 0, %v290
    %v292 = vrot.slane %v279, %v291
    %v293 = vlaneseq
    %v294 = vshrl.u32 %v293, 7
    %v295 = vsub.s32 0, %v294
    %v296 = vrot.slane %v286, %v295
    %v297 = vlaneseq
    %v298 = vshrl.u32 %v297, 7
    %v299 = vsub.s32 0, %v298
    %v300 = vrot.slane %v287, %v299
    %v301 = vlaneseq
    %v302 = vshrl.u32 %v301, 7
    %v303 = vsub.s32 0, %v302
    %v304 = vrot.slane %v288, %v303
    %v309 = vadd.f32 %v169, %v292
    %v310 = vadd.f32 %v174, %v296
    %v311 = vadd.f32 %v179, %v300
    %v312 = vadd.f32 %v184, %v304
    %v313 = vtanh.pop %v309
    %v314 = vtanh.pop %v310
    %v315 = vtanh.pop %v311
    %v316 = vtanh.pop %v312
    %v317 = vlaneseq
    %v318 = vshrl.u32 %v317, 7
    %v319 = vsub.s32 0, %v318
    %v320 = vrot.slane %v88, %v319
    %v321 = vmul.f32 %v313, %v320
    %v322 = vmul.f32 %v314, %v320
    %v323 = vmul.f32 %v315, %v320
    %v324 = vmul.f32 %v316, %v320
    %v325 = vsel %vm89, %v321, 0.0
    %326 = vadd.xlane.f32.xlu0 %v325
    %v327 = vpop.xlane.xlu0 %326
    %v328 = vsel %vm89, %v322, 0.0
    %329 = vadd.xlane.f32.xlu0 %v328
    %v330 = vpop.xlane.xlu0 %329
    %v331 = vsel %vm89, %v323, 0.0
    %332 = vadd.xlane.f32.xlu0 %v331
    %v333 = vpop.xlane.xlu0 %332
    %v334 = vsel %vm89, %v324, 0.0
    %335 = vadd.xlane.f32.xlu0 %v334
    %v336 = vpop.xlane.xlu0 %335
    %v337 = vrot.slane %v327, 4
    %v338 = vmax.f32 %v327, %v337
    %v339 = vrot.slane %v338, 2
    %v340 = vmax.f32 %v338, %v339
    %v341 = vrot.slane %v340, 1
    %v342 = vmax.f32 %v340, %v341
    %v343 = vrot.slane %v330, 4
    %v344 = vmax.f32 %v330, %v343
    %v345 = vrot.slane %v344, 2
    %v346 = vmax.f32 %v344, %v345
    %v347 = vrot.slane %v346, 1
    %v348 = vmax.f32 %v346, %v347
    %v349 = vrot.slane %v333, 4
    %v350 = vmax.f32 %v333, %v349
    %v351 = vrot.slane %v350, 2
    %v352 = vmax.f32 %v350, %v351
    %v353 = vrot.slane %v352, 1
    %v354 = vmax.f32 %v352, %v353
    %v355 = vrot.slane %v336, 4
    %v356 = vmax.f32 %v336, %v355
    %v357 = vrot.slane %v356, 2
    %v358 = vmax.f32 %v356, %v357
    %v359 = vrot.slane %v358, 1
    %v360 = vmax.f32 %v358, %v359
    %v361 = vsub.f32 %v327, %v342
    %v362 = vsub.f32 %v330, %v348
    %v363 = vsub.f32 %v333, %v354
    %v364 = vsub.f32 %v336, %v360
    %v365 = vmul.f32 %v361, 1.442695
    %v366 = vpow.pop %v365
    %v367 = vmul.f32 %v362, 1.442695
    %v368 = vpow.pop %v367
    %v369 = vmul.f32 %v363, 1.442695
    %v370 = vpow.pop %v369
    %v371 = vmul.f32 %v364, 1.442695
    %v372 = vpow.pop %v371
    %v373 = vrot.slane %v366, 4
    %v374 = vadd.f32 %v366, %v373
    %v375 = vrot.slane %v374, 2
    %v376 = vadd.f32 %v374, %v375
    %v377 = vrot.slane %v376, 1
    %v378 = vadd.f32 %v376, %v377
    %v379 = vrot.slane %v368, 4
    %v380 = vadd.f32 %v368, %v379
    %v381 = vrot.slane %v380, 2
    %v382 = vadd.f32 %v380, %v381
    %v383 = vrot.slane %v382, 1
    %v384 = vadd.f32 %v382, %v383
    %v385 = vrot.slane %v370, 4
    %v386 = vadd.f32 %v370, %v385
    %v387 = vrot.slane %v386, 2
    %v388 = vadd.f32 %v386, %v387
    %v389 = vrot.slane %v388, 1
    %v390 = vadd.f32 %v388, %v389
    %v391 = vrot.slane %v372, 4
    %v392 = vadd.f32 %v372, %v391
    %v393 = vrot.slane %v392, 2
    %v394 = vadd.f32 %v392, %v393
    %v395 = vrot.slane %v394, 1
    %v396 = vadd.f32 %v394, %v395
    %v397 = vrcp.pop %v378
    %v398 = vmul.f32 %v366, %v397
    %v399 = vrcp.pop %v384
    %v400 = vmul.f32 %v368, %v399
    %v401 = vrcp.pop %v390
    %v402 = vmul.f32 %v370, %v401
    %v403 = vrcp.pop %v396
    %v404 = vmul.f32 %v372, %v403
    %v405 = vmul.f32 %v398, %v73
    %v406 = vmul.f32 %v400, %v74
    %v407 = vmul.f32 %v402, %v75
    %v408 = vmul.f32 %v404, %v76
    %v409 = vsel %vm89, %v405, 0.0
    %v410 = vrot.slane %v409, 4
    %v411 = vadd.f32 %v409, %v410
    %v412 = vrot.slane %v411, 2
    %v413 = vadd.f32 %v411, %v412
    %v414 = vrot.slane %v413, 1
    %v415 = vadd.f32 %v413, %v414
    %v416 = vsel %vm89, %v406, 0.0
    %v417 = vrot.slane %v416, 4
    %v418 = vadd.f32 %v416, %v417
    %v419 = vrot.slane %v418, 2
    %v420 = vadd.f32 %v418, %v419
    %v421 = vrot.slane %v420, 1
    %v422 = vadd.f32 %v420, %v421
    %v423 = vsel %vm89, %v407, 0.0
    %v424 = vrot.slane %v423, 4
    %v425 = vadd.f32 %v423, %v424
    %v426 = vrot.slane %v425, 2
    %v427 = vadd.f32 %v425, %v426
    %v428 = vrot.slane %v427, 1
    %v429 = vadd.f32 %v427, %v428
    %v430 = vsel %vm89, %v408, 0.0
    %v431 = vrot.slane %v430, 4
    %v432 = vadd.f32 %v430, %v431
    %v433 = vrot.slane %v432, 2
    %v434 = vadd.f32 %v432, %v433
    %v435 = vrot.slane %v434, 1
    %v436 = vadd.f32 %v434, %v435
    %v437 = vlaneseq
    %v438 = vand.u32 %v437, 127
    %v439 = vlaneseq
    %v440 = vshrl.u32 %v439, 7
    %vm441 = vcmp.eq.s32.totalorder %v440, 0
    %s442 = sld [smem:[#allocation2]]
    %v443 = vstv %s442
    %vm444 = vcmp.eq.s32.totalorder %v438, %v443
    %vm445 = vmand %vm441, %vm444
    %v446 = vsel %vm445, 1.0, 0.0
    %vm447 = vcmp.eq.s32.totalorder %v440, 1
    %s448 = sld [smem:[#allocation2 + $0x1]]
    %v449 = vstv %s448
    %vm450 = vcmp.eq.s32.totalorder %v438, %v449
    %vm451 = vmand %vm447, %vm450
    %v452 = vsel %vm451, 1.0, %v446
    %vm453 = vcmp.eq.s32.totalorder %v440, 2
    %s454 = sld [smem:[#allocation2 + $0x2]]
    %v455 = vstv %s454
    %vm456 = vcmp.eq.s32.totalorder %v438, %v455
    %vm457 = vmand %vm453, %vm456
    %v458 = vsel %vm457, 1.0, %v452
    %vm459 = vcmp.eq.s32.totalorder %v440, 3
    %s460 = sld [smem:[#allocation2 + $0x3]]
    %v461 = vstv %s460
    %vm462 = vcmp.eq.s32.totalorder %v438, %v461
    %vm463 = vmand %vm459, %vm462
    %v464 = vsel %vm463, 1.0, %v458
    %v465 = vld [vmem:[#allocation9] sm:$0xff]
    %v466 = vld [vmem:[#allocation9 + $0x8] sm:$0xff]
    %v467 = vld [vmem:[#allocation9 + $0x10] sm:$0xff]
    %v468 = vld [vmem:[#allocation9 + $0x18] sm:$0xff]
    %v469 = vld [vmem:[#allocation9 + $0x20] sm:$0xff]
    %v470 = vld [vmem:[#allocation9 + $0x28] sm:$0xff]
    %v471 = vld [vmem:[#allocation9 + $0x30] sm:$0xff]
    %v472 = vld [vmem:[#allocation9 + $0x38] sm:$0xff]
    %v473 = vld [vmem:[#allocation9 + $0x40] sm:$0xff]
    %v474 = vld [vmem:[#allocation9 + $0x48] sm:$0xff]
    %v475 = vld [vmem:[#allocation9 + $0x50] sm:$0xff]
    %v476 = vld [vmem:[#allocation9 + $0x58] sm:$0xff]
    %vm481 = vcmask 1041409
    %v482 = vsel %vm481, %v422, %v415
    %vm483 = vcmask 1042434
    %v484 = vsel %vm483, %v429, %v482
    %vm485 = vcmask 1043459
    %v486 = vsel %vm485, %v436, %v484
    %v487 = vsel %vm89, %v486, 0
    %489 = vmatprep.subr.mxu0 0.0
    %490 = vmatpush1.msra.mxu0 0.0
    %491 = vmatprep.subr.mxu0 0.0
    %492 = vmatpush1.msra.mxu0 0.0
    %493 = vmatprep.subr.mxu0 0.0
    %494 = vmatpush1.msra.mxu0 0.0
    %495 = vmatprep.subr.mxu0 0.0
    %496 = vmatpush1.msra.mxu0 0.0
    %497 = vmatprep.subr.mxu0 0.0
    %498 = vmatpush1.msra.mxu0 0.0
    %499 = vmatprep.subr.mxu0 0.0
    %500 = vmatpush1.msra.mxu0 0.0
    %501 = vmatprep.subr.mxu0 0.0
    %502 = vmatpush1.msra.mxu0 0.0
    %503 = vmatprep.subr.mxu0 0.0
    %504 = vmatpush1.msra.mxu0 0.0
    %505 = vmatprep.subr.mxu0 0.0
    %506 = vmatpush1.msra.mxu0 0.0
    %507 = vmatprep.subr.mxu0 0.0
    %508 = vmatpush1.msra.mxu0 0.0
    %509 = vmatprep.subr.mxu0 0.0
    %510 = vmatpush1.msra.mxu0 0.0
    %511 = vmatprep.subr.mxu0 0.0
    %512 = vmatpush1.msra.mxu0 0.0
    %513 = vmatprep.subr.mxu0 0.0
    %514 = vmatpush1.msra.mxu0 %v476
    %515 = vmatprep.subr.mxu0 0.0
    %516 = vmatpush1.msra.mxu0 %v475
    %517 = vmatprep.subr.mxu0 0.0
    %518 = vmatpush1.msra.mxu0 %v474
    %519 = vmatprep.subr.mxu0 0.0
    %520 = vmatpush1.msra.mxu0 %v473
    %521 = vmatprep.subr.mxu0 0.0
    %522 = vmatpush2.msra.mxu0 0.0
    %523 = vmatprep.subr.mxu0 0.0
    %524 = vmatpush2.msra.mxu0 0.0
    %525 = vmatprep.subr.mxu0 0.0
    %526 = vmatpush2.msra.mxu0 0.0
    %527 = vmatprep.subr.mxu0 0.0
    %528 = vmatpush2.msra.mxu0 0.0
    %529 = vmatprep.subr.mxu0 0.0
    %530 = vmatpush2.msra.mxu0 0.0
    %531 = vmatprep.subr.mxu0 0.0
    %532 = vmatpush2.msra.mxu0 0.0
    %533 = vmatprep.subr.mxu0 0.0
    %534 = vmatpush2.msra.mxu0 0.0
    %535 = vmatprep.subr.mxu0 0.0
    %536 = vmatpush2.msra.mxu0 0.0
    %537 = vmatprep.subr.mxu0 0.0
    %538 = vmatpush2.msra.mxu0 0.0
    %539 = vmatprep.subr.mxu0 0.0
    %540 = vmatpush2.msra.mxu0 0.0
    %541 = vmatprep.subr.mxu0 0.0
    %542 = vmatpush2.msra.mxu0 0.0
    %543 = vmatprep.subr.mxu0 0.0
    %544 = vmatpush2.msra.mxu0 0.0
    %545 = vmatprep.subr.mxu0 0.0
    %546 = vmatpush2.msra.mxu0 0.0
    %547 = vmatprep.subr.mxu0 0.0
    %548 = vmatpush2.msra.mxu0 0.0
    %549 = vmatprep.subr.mxu0 0.0
    %550 = vmatpush2.msra.mxu0 0.0
    %551 = vmatprep.subr.mxu0 0.0
    %552 = vmatpush2.msra.mxu0 0.0
    %553 = vmatprep.mubr.f32.mxu0 0.0
    %554 = vmatmul.mubr.f32.gmra.mxu0 %v487
    %v555 = vpop.f32.mrf.mxu0
    %v556 = vadd.f32 0.0, %v555
    %v557 = vpop.f32.mrf.mxu0
    %558 = vdwg.mxu0
    %vm559 = vcmask 523264
    %v561 = vsel %vm559, %v464, 0
    %563 = vmatprep.subr.mxu0 0.0
    %564 = vmatpush1.msra.mxu0 0.0
    %565 = vmatprep.subr.mxu0 0.0
    %566 = vmatpush1.msra.mxu0 0.0
    %567 = vmatprep.subr.mxu0 0.0
    %568 = vmatpush1.msra.mxu0 0.0
    %569 = vmatprep.subr.mxu0 0.0
    %570 = vmatpush1.msra.mxu0 0.0
    %571 = vmatprep.subr.mxu0 0.0
    %572 = vmatpush1.msra.mxu0 0.0
    %573 = vmatprep.subr.mxu0 0.0
    %574 = vmatpush1.msra.mxu0 0.0
    %575 = vmatprep.subr.mxu0 0.0
    %576 = vmatpush1.msra.mxu0 0.0
    %577 = vmatprep.subr.mxu0 0.0
    %578 = vmatpush1.msra.mxu0 0.0
    %579 = vmatprep.subr.mxu0 0.0
    %580 = vmatpush1.msra.mxu0 %v472
    %581 = vmatprep.subr.mxu0 0.0
    %582 = vmatpush1.msra.mxu0 %v471
    %583 = vmatprep.subr.mxu0 0.0
    %584 = vmatpush1.msra.mxu0 %v470
    %585 = vmatprep.subr.mxu0 0.0
    %586 = vmatpush1.msra.mxu0 %v469
    %587 = vmatprep.subr.mxu0 0.0
    %588 = vmatpush1.msra.mxu0 %v468
    %589 = vmatprep.subr.mxu0 0.0
    %590 = vmatpush1.msra.mxu0 %v467
    %591 = vmatprep.subr.mxu0 0.0
    %592 = vmatpush1.msra.mxu0 %v466
    %593 = vmatprep.subr.mxu0 0.0
    %594 = vmatpush1.msra.mxu0 %v465
    %595 = vmatprep.subr.mxu0 0.0
    %596 = vmatpush2.msra.mxu0 0.0
    %597 = vmatprep.subr.mxu0 0.0
    %598 = vmatpush2.msra.mxu0 0.0
    %599 = vmatprep.subr.mxu0 0.0
    %600 = vmatpush2.msra.mxu0 0.0
    %601 = vmatprep.subr.mxu0 0.0
    %602 = vmatpush2.msra.mxu0 0.0
    %603 = vmatprep.subr.mxu0 0.0
    %604 = vmatpush2.msra.mxu0 0.0
    %605 = vmatprep.subr.mxu0 0.0
    %606 = vmatpush2.msra.mxu0 0.0
    %607 = vmatprep.subr.mxu0 0.0
    %608 = vmatpush2.msra.mxu0 0.0
    %609 = vmatprep.subr.mxu0 0.0
    %610 = vmatpush2.msra.mxu0 0.0
    %611 = vmatprep.subr.mxu0 0.0
    %612 = vmatpush2.msra.mxu0 0.0
    %613 = vmatprep.subr.mxu0 0.0
    %614 = vmatpush2.msra.mxu0 0.0
    %615 = vmatprep.subr.mxu0 0.0
    %616 = vmatpush2.msra.mxu0 0.0
    %617 = vmatprep.subr.mxu0 0.0
    %618 = vmatpush2.msra.mxu0 0.0
    %619 = vmatprep.subr.mxu0 0.0
    %620 = vmatpush2.msra.mxu0 0.0
    %621 = vmatprep.subr.mxu0 0.0
    %622 = vmatpush2.msra.mxu0 0.0
    %623 = vmatprep.subr.mxu0 0.0
    %624 = vmatpush2.msra.mxu0 0.0
    %625 = vmatprep.subr.mxu0 0.0
    %626 = vmatpush2.msra.mxu0 0.0
    %627 = vmatprep.mubr.f32.mxu0 0.0
    %628 = vmatmul.mubr.f32.gmra.mxu0 %v561
    %v629 = vpop.f32.mrf.mxu0
    %v630 = vadd.f32 %v556, %v629
    %v631 = vpop.f32.mrf.mxu0
    %632 = vdwg.mxu0
    %v633 = vld [vmem:[#allocation6] sm:$0xf]
    %v634 = vld [vmem:[#allocation9 + $0x60] sm:$0xff]
    %v635 = vld [vmem:[#allocation9 + $0x68] sm:$0xff]
    %v636 = vld [vmem:[#allocation9 + $0x70] sm:$0xff]
    %v637 = vld [vmem:[#allocation9 + $0x78] sm:$0xff]
    %v639 = vsel %vm89, %v633, 0
    %641 = vmatprep.subr.mxu0 0.0
    %642 = vmatpush1.msra.mxu0 0.0
    %643 = vmatprep.subr.mxu0 0.0
    %644 = vmatpush1.msra.mxu0 0.0
    %645 = vmatprep.subr.mxu0 0.0
    %646 = vmatpush1.msra.mxu0 0.0
    %647 = vmatprep.subr.mxu0 0.0
    %648 = vmatpush1.msra.mxu0 0.0
    %649 = vmatprep.subr.mxu0 0.0
    %650 = vmatpush1.msra.mxu0 0.0
    %651 = vmatprep.subr.mxu0 0.0
    %652 = vmatpush1.msra.mxu0 0.0
    %653 = vmatprep.subr.mxu0 0.0
    %654 = vmatpush1.msra.mxu0 0.0
    %655 = vmatprep.subr.mxu0 0.0
    %656 = vmatpush1.msra.mxu0 0.0
    %657 = vmatprep.subr.mxu0 0.0
    %658 = vmatpush1.msra.mxu0 0.0
    %659 = vmatprep.subr.mxu0 0.0
    %660 = vmatpush1.msra.mxu0 0.0
    %661 = vmatprep.subr.mxu0 0.0
    %662 = vmatpush1.msra.mxu0 0.0
    %663 = vmatprep.subr.mxu0 0.0
    %664 = vmatpush1.msra.mxu0 0.0
    %665 = vmatprep.subr.mxu0 0.0
    %666 = vmatpush1.msra.mxu0 %v637
    %667 = vmatprep.subr.mxu0 0.0
    %668 = vmatpush1.msra.mxu0 %v636
    %669 = vmatprep.subr.mxu0 0.0
    %670 = vmatpush1.msra.mxu0 %v635
    %671 = vmatprep.subr.mxu0 0.0
    %672 = vmatpush1.msra.mxu0 %v634
    %673 = vmatprep.subr.mxu0 0.0
    %674 = vmatpush2.msra.mxu0 0.0
    %675 = vmatprep.subr.mxu0 0.0
    %676 = vmatpush2.msra.mxu0 0.0
    %677 = vmatprep.subr.mxu0 0.0
    %678 = vmatpush2.msra.mxu0 0.0
    %679 = vmatprep.subr.mxu0 0.0
    %680 = vmatpush2.msra.mxu0 0.0
    %681 = vmatprep.subr.mxu0 0.0
    %682 = vmatpush2.msra.mxu0 0.0
    %683 = vmatprep.subr.mxu0 0.0
    %684 = vmatpush2.msra.mxu0 0.0
    %685 = vmatprep.subr.mxu0 0.0
    %686 = vmatpush2.msra.mxu0 0.0
    %687 = vmatprep.subr.mxu0 0.0
    %688 = vmatpush2.msra.mxu0 0.0
    %689 = vmatprep.subr.mxu0 0.0
    %690 = vmatpush2.msra.mxu0 0.0
    %691 = vmatprep.subr.mxu0 0.0
    %692 = vmatpush2.msra.mxu0 0.0
    %693 = vmatprep.subr.mxu0 0.0
    %694 = vmatpush2.msra.mxu0 0.0
    %695 = vmatprep.subr.mxu0 0.0
    %696 = vmatpush2.msra.mxu0 0.0
    %697 = vmatprep.subr.mxu0 0.0
    %698 = vmatpush2.msra.mxu0 0.0
    %699 = vmatprep.subr.mxu0 0.0
    %700 = vmatpush2.msra.mxu0 0.0
    %701 = vmatprep.subr.mxu0 0.0
    %702 = vmatpush2.msra.mxu0 0.0
    %703 = vmatprep.subr.mxu0 0.0
    %704 = vmatpush2.msra.mxu0 0.0
    %705 = vmatprep.mubr.f32.mxu0 0.0
    %706 = vmatmul.mubr.f32.gmra.mxu0 %v639
    %v707 = vpop.f32.mrf.mxu0
    %v708 = vadd.f32 0.0, %v707
    %v709 = vpop.f32.mrf.mxu0
    %710 = vdwg.mxu0
    %v711 = vadd.f32 %v630, %v708
    %v712 = vld [vmem:[#allocation9 + $0xc0] sm:$0x1]
    %v713 = vlaneseq
    %v714 = vshrl.u32 %v713, 7
    %v715 = vsub.s32 0, %v714
    %v716 = vrot.slane %v712, %v715
    %v717 = vadd.f32 %v711, %v716
    %v718 = vxor.u32 %v717, 2147483648
    %v719 = vmul.f32 %v718, 1.442695
    %v720 = vpow.pop %v719
    %v721 = vadd.f32 %v720, 1.0
    %v722 = vrcp.pop %v721
    %v723 = vmul.f32 1.0, %v722
    %v724 = vtanh.pop %v717
    %s725 = scalar_lea.vmem [#allocation6], 8
    %v726 = vld [vmem:[%s725] sm:$0xf]
    %728 = vrot.lane.b32.xlu0 %v726, 32
    %v729 = vpop.permute.xlu0 %728
    %v731 = vmul.f32 %v723, %v729
    %733 = vrot.lane.b32.xlu0 %v724, 64
    %v734 = vpop.permute.xlu0 %733
    %v736 = vmul.f32 %v723, %v734
    %738 = vrot.lane.b32.xlu0 %v736, 32
    %v739 = vpop.permute.xlu0 %738
    %v741 = vadd.f32 %v731, %v739
    %v742 = vtanh.pop %v741
    %744 = vrot.lane.b32.xlu0 %v742, 64
    %v745 = vpop.permute.xlu0 %744
    %v747 = vmul.f32 %v723, %v745
    %749 = vrot.lane.b32.xlu0 %v747, 32
    %v750 = vpop.permute.xlu0 %749
    %vm752 = vcmask 257024
    %753 = vst.msk [vmem:[#allocation11] sm:$0xf] %vm752, %v750
    %755 = vrot.lane.b32.xlu0 %v741, 96
    %v756 = vpop.permute.xlu0 %755
    %s758 = scalar_lea.vmem [#allocation11], 8
    %759 = vst.msk [vmem:[%s758] sm:$0xf] %vm752, %v756
    %v760 = vld [vmem:[#allocation9 + $0x80] sm:$0xff]
    %v761 = vld [vmem:[#allocation9 + $0x88] sm:$0xff]
    %v762 = vld [vmem:[#allocation9 + $0x90] sm:$0xff]
    %v763 = vld [vmem:[#allocation9 + $0x98] sm:$0xff]
    %v764 = vld [vmem:[%s77] sm:$0xf]
    %v765 = vld [vmem:[#allocation9 + $0xa0] sm:$0xff]
    %v766 = vld [vmem:[#allocation9 + $0xa8] sm:$0xff]
    %v767 = vld [vmem:[#allocation9 + $0xb0] sm:$0xff]
    %v768 = vld [vmem:[#allocation9 + $0xb8] sm:$0xff]
    %v770 = vsel %vm89, %v764, 0
    %772 = vmatprep.subr.mxu0 0.0
    %773 = vmatpush1.msra.mxu0 0.0
    %774 = vmatprep.subr.mxu0 0.0
    %775 = vmatpush1.msra.mxu0 0.0
    %776 = vmatprep.subr.mxu0 0.0
    %777 = vmatpush1.msra.mxu0 0.0
    %778 = vmatprep.subr.mxu0 0.0
    %779 = vmatpush1.msra.mxu0 0.0
    %780 = vmatprep.subr.mxu0 0.0
    %781 = vmatpush1.msra.mxu0 0.0
    %782 = vmatprep.subr.mxu0 0.0
    %783 = vmatpush1.msra.mxu0 0.0
    %784 = vmatprep.subr.mxu0 0.0
    %785 = vmatpush1.msra.mxu0 0.0
    %786 = vmatprep.subr.mxu0 0.0
    %787 = vmatpush1.msra.mxu0 0.0
    %788 = vmatprep.subr.mxu0 0.0
    %789 = vmatpush1.msra.mxu0 0.0
    %790 = vmatprep.subr.mxu0 0.0
    %791 = vmatpush1.msra.mxu0 0.0
    %792 = vmatprep.subr.mxu0 0.0
    %793 = vmatpush1.msra.mxu0 0.0
    %794 = vmatprep.subr.mxu0 0.0
    %795 = vmatpush1.msra.mxu0 0.0
    %796 = vmatprep.subr.mxu0 0.0
    %797 = vmatpush1.msra.mxu0 %v768
    %798 = vmatprep.subr.mxu0 0.0
    %799 = vmatpush1.msra.mxu0 %v767
    %800 = vmatprep.subr.mxu0 0.0
    %801 = vmatpush1.msra.mxu0 %v766
    %802 = vmatprep.subr.mxu0 0.0
    %803 = vmatpush1.msra.mxu0 %v765
    %804 = vmatprep.subr.mxu0 0.0
    %805 = vmatpush2.msra.mxu0 0.0
    %806 = vmatprep.subr.mxu0 0.0
    %807 = vmatpush2.msra.mxu0 0.0
    %808 = vmatprep.subr.mxu0 0.0
    %809 = vmatpush2.msra.mxu0 0.0
    %810 = vmatprep.subr.mxu0 0.0
    %811 = vmatpush2.msra.mxu0 0.0
    %812 = vmatprep.subr.mxu0 0.0
    %813 = vmatpush2.msra.mxu0 0.0
    %814 = vmatprep.subr.mxu0 0.0
    %815 = vmatpush2.msra.mxu0 0.0
    %816 = vmatprep.subr.mxu0 0.0
    %817 = vmatpush2.msra.mxu0 0.0
    %818 = vmatprep.subr.mxu0 0.0
    %819 = vmatpush2.msra.mxu0 0.0
    %820 = vmatprep.subr.mxu0 0.0
    %821 = vmatpush2.msra.mxu0 0.0
    %822 = vmatprep.subr.mxu0 0.0
    %823 = vmatpush2.msra.mxu0 0.0
    %824 = vmatprep.subr.mxu0 0.0
    %825 = vmatpush2.msra.mxu0 0.0
    %826 = vmatprep.subr.mxu0 0.0
    %827 = vmatpush2.msra.mxu0 0.0
    %828 = vmatprep.subr.mxu0 0.0
    %829 = vmatpush2.msra.mxu0 0.0
    %830 = vmatprep.subr.mxu0 0.0
    %831 = vmatpush2.msra.mxu0 0.0
    %832 = vmatprep.subr.mxu0 0.0
    %833 = vmatpush2.msra.mxu0 0.0
    %834 = vmatprep.subr.mxu0 0.0
    %835 = vmatpush2.msra.mxu0 0.0
    %836 = vmatprep.mubr.f32.mxu0 0.0
    %837 = vmatmul.mubr.f32.gmra.mxu0 %v770
    %v838 = vpop.f32.mrf.mxu0
    %v839 = vadd.f32 0.0, %v838
    %v840 = vpop.f32.mrf.mxu0
    %841 = vdwg.mxu0
    %v842 = vsel %vm89, %v750, 0
    %844 = vmatprep.subr.mxu0 0.0
    %845 = vmatpush1.msra.mxu0 0.0
    %846 = vmatprep.subr.mxu0 0.0
    %847 = vmatpush1.msra.mxu0 0.0
    %848 = vmatprep.subr.mxu0 0.0
    %849 = vmatpush1.msra.mxu0 0.0
    %850 = vmatprep.subr.mxu0 0.0
    %851 = vmatpush1.msra.mxu0 0.0
    %852 = vmatprep.subr.mxu0 0.0
    %853 = vmatpush1.msra.mxu0 0.0
    %854 = vmatprep.subr.mxu0 0.0
    %855 = vmatpush1.msra.mxu0 0.0
    %856 = vmatprep.subr.mxu0 0.0
    %857 = vmatpush1.msra.mxu0 0.0
    %858 = vmatprep.subr.mxu0 0.0
    %859 = vmatpush1.msra.mxu0 0.0
    %860 = vmatprep.subr.mxu0 0.0
    %861 = vmatpush1.msra.mxu0 0.0
    %862 = vmatprep.subr.mxu0 0.0
    %863 = vmatpush1.msra.mxu0 0.0
    %864 = vmatprep.subr.mxu0 0.0
    %865 = vmatpush1.msra.mxu0 0.0
    %866 = vmatprep.subr.mxu0 0.0
    %867 = vmatpush1.msra.mxu0 0.0
    %868 = vmatprep.subr.mxu0 0.0
    %869 = vmatpush1.msra.mxu0 %v763
    %870 = vmatprep.subr.mxu0 0.0
    %871 = vmatpush1.msra.mxu0 %v762
    %872 = vmatprep.subr.mxu0 0.0
    %873 = vmatpush1.msra.mxu0 %v761
    %874 = vmatprep.subr.mxu0 0.0
    %875 = vmatpush1.msra.mxu0 %v760
    %876 = vmatprep.subr.mxu0 0.0
    %877 = vmatpush2.msra.mxu0 0.0
    %878 = vmatprep.subr.mxu0 0.0
    %879 = vmatpush2.msra.mxu0 0.0
    %880 = vmatprep.subr.mxu0 0.0
    %881 = vmatpush2.msra.mxu0 0.0
    %882 = vmatprep.subr.mxu0 0.0
    %883 = vmatpush2.msra.mxu0 0.0
    %884 = vmatprep.subr.mxu0 0.0
    %885 = vmatpush2.msra.mxu0 0.0
    %886 = vmatprep.subr.mxu0 0.0
    %887 = vmatpush2.msra.mxu0 0.0
    %888 = vmatprep.subr.mxu0 0.0
    %889 = vmatpush2.msra.mxu0 0.0
    %890 = vmatprep.subr.mxu0 0.0
    %891 = vmatpush2.msra.mxu0 0.0
    %892 = vmatprep.subr.mxu0 0.0
    %893 = vmatpush2.msra.mxu0 0.0
    %894 = vmatprep.subr.mxu0 0.0
    %895 = vmatpush2.msra.mxu0 0.0
    %896 = vmatprep.subr.mxu0 0.0
    %897 = vmatpush2.msra.mxu0 0.0
    %898 = vmatprep.subr.mxu0 0.0
    %899 = vmatpush2.msra.mxu0 0.0
    %900 = vmatprep.subr.mxu0 0.0
    %901 = vmatpush2.msra.mxu0 0.0
    %902 = vmatprep.subr.mxu0 0.0
    %903 = vmatpush2.msra.mxu0 0.0
    %904 = vmatprep.subr.mxu0 0.0
    %905 = vmatpush2.msra.mxu0 0.0
    %906 = vmatprep.subr.mxu0 0.0
    %907 = vmatpush2.msra.mxu0 0.0
    %908 = vmatprep.mubr.f32.mxu0 0.0
    %909 = vmatmul.mubr.f32.gmra.mxu0 %v842
    %v910 = vpop.f32.mrf.mxu0
    %v911 = vadd.f32 %v839, %v910
    %v912 = vpop.f32.mrf.mxu0
    %913 = vdwg.mxu0
    %v914 = vld [vmem:[#allocation9 + $0xc8] sm:$0x1]
    %v915 = vlaneseq
    %v916 = vshrl.u32 %v915, 7
    %v917 = vsub.s32 0, %v916
    %v918 = vrot.slane %v914, %v917
    %v919 = vadd.f32 %v911, %v918
    %v920 = vxor.u32 %v919, 2147483648
    %v921 = vmul.f32 %v920, 1.442695
    %v922 = vpow.pop %v921
    %v923 = vadd.f32 %v922, 1.0
    %v924 = vrcp.pop %v923
    %v925 = vmul.f32 1.0, %v924
    %v926 = vtanh.pop %v919
    %s927 = scalar_lea.vmem [#allocation6], 12
    %v928 = vld [vmem:[%s927] sm:$0xf]
    %930 = vrot.lane.b32.xlu0 %v928, 32
    %v931 = vpop.permute.xlu0 %930
    %v933 = vmul.f32 %v925, %v931
    %935 = vrot.lane.b32.xlu0 %v926, 64
    %v936 = vpop.permute.xlu0 %935
    %v938 = vmul.f32 %v925, %v936
    %940 = vrot.lane.b32.xlu0 %v938, 32
    %v941 = vpop.permute.xlu0 %940
    %v943 = vadd.f32 %v933, %v941
    %v944 = vtanh.pop %v943
    %946 = vrot.lane.b32.xlu0 %v944, 64
    %v947 = vpop.permute.xlu0 %946
    %v949 = vmul.f32 %v925, %v947
    %951 = vrot.lane.b32.xlu0 %v949, 32
    %v952 = vpop.permute.xlu0 %951
    %s954 = scalar_lea.vmem [#allocation11], 4
    %955 = vst.msk [vmem:[%s954] sm:$0xf] %vm752, %v952
    %957 = vrot.lane.b32.xlu0 %v943, 96
    %v958 = vpop.permute.xlu0 %957
    %s960 = scalar_lea.vmem [#allocation11], 12
    %961 = vst.msk [vmem:[%s960] sm:$0xf] %vm752, %v958
    %v962 = vld [vmem:[#allocation9 + $0x120] sm:$0xff]
    %v963 = vld [vmem:[#allocation9 + $0x128] sm:$0xff]
    %v964 = vld [vmem:[#allocation9 + $0x130] sm:$0xff]
    %v965 = vld [vmem:[#allocation9 + $0x138] sm:$0xff]
    %v966 = vld [vmem:[#allocation9 + $0x140] sm:$0xff]
    %v967 = vld [vmem:[#allocation9 + $0x148] sm:$0xff]
    %v968 = vld [vmem:[#allocation9 + $0x150] sm:$0xff]
    %v969 = vld [vmem:[#allocation9 + $0x158] sm:$0xff]
    %v970 = vld [vmem:[#allocation9 + $0x160] sm:$0x1]
    %971 = vmatprep.subr.mxu0 0.0
    %972 = vmatpush1.msra.mxu0 0.0
    %973 = vmatprep.subr.mxu0 0.0
    %974 = vmatpush1.msra.mxu0 0.0
    %975 = vmatprep.subr.mxu0 0.0
    %976 = vmatpush1.msra.mxu0 0.0
    %977 = vmatprep.subr.mxu0 0.0
    %978 = vmatpush1.msra.mxu0 0.0
    %979 = vmatprep.subr.mxu0 0.0
    %980 = vmatpush1.msra.mxu0 0.0
    %981 = vmatprep.subr.mxu0 0.0
    %982 = vmatpush1.msra.mxu0 0.0
    %983 = vmatprep.subr.mxu0 0.0
    %984 = vmatpush1.msra.mxu0 0.0
    %985 = vmatprep.subr.mxu0 0.0
    %986 = vmatpush1.msra.mxu0 0.0
    %987 = vmatprep.subr.mxu0 0.0
    %988 = vmatpush1.msra.mxu0 0.0
    %989 = vmatprep.subr.mxu0 0.0
    %990 = vmatpush1.msra.mxu0 0.0
    %991 = vmatprep.subr.mxu0 0.0
    %992 = vmatpush1.msra.mxu0 0.0
    %993 = vmatprep.subr.mxu0 0.0
    %994 = vmatpush1.msra.mxu0 0.0
    %995 = vmatprep.subr.mxu0 0.0
    %996 = vmatpush1.msra.mxu0 %v969
    %997 = vmatprep.subr.mxu0 0.0
    %998 = vmatpush1.msra.mxu0 %v968
    %999 = vmatprep.subr.mxu0 0.0
    %1000 = vmatpush1.msra.mxu0 %v967
    %1001 = vmatprep.subr.mxu0 0.0
    %1002 = vmatpush1.msra.mxu0 %v966
    %1003 = vmatprep.subr.mxu0 0.0
    %1004 = vmatpush2.msra.mxu0 0.0
    %1005 = vmatprep.subr.mxu0 0.0
    %1006 = vmatpush2.msra.mxu0 0.0
    %1007 = vmatprep.subr.mxu0 0.0
    %1008 = vmatpush2.msra.mxu0 0.0
    %1009 = vmatprep.subr.mxu0 0.0
    %1010 = vmatpush2.msra.mxu0 0.0
    %1011 = vmatprep.subr.mxu0 0.0
    %1012 = vmatpush2.msra.mxu0 0.0
    %1013 = vmatprep.subr.mxu0 0.0
    %1014 = vmatpush2.msra.mxu0 0.0
    %1015 = vmatprep.subr.mxu0 0.0
    %1016 = vmatpush2.msra.mxu0 0.0
    %1017 = vmatprep.subr.mxu0 0.0
    %1018 = vmatpush2.msra.mxu0 0.0
    %1019 = vmatprep.subr.mxu0 0.0
    %1020 = vmatpush2.msra.mxu0 0.0
    %1021 = vmatprep.subr.mxu0 0.0
    %1022 = vmatpush2.msra.mxu0 0.0
    %1023 = vmatprep.subr.mxu0 0.0
    %1024 = vmatpush2.msra.mxu0 0.0
    %1025 = vmatprep.subr.mxu0 0.0
    %1026 = vmatpush2.msra.mxu0 0.0
    %1027 = vmatprep.subr.mxu0 0.0
    %1028 = vmatpush2.msra.mxu0 0.0
    %1029 = vmatprep.subr.mxu0 0.0
    %1030 = vmatpush2.msra.mxu0 0.0
    %1031 = vmatprep.subr.mxu0 0.0
    %1032 = vmatpush2.msra.mxu0 0.0
    %1033 = vmatprep.subr.mxu0 0.0
    %1034 = vmatpush2.msra.mxu0 0.0
    %1035 = vmatprep.mubr.f32.mxu0 0.0
    %1036 = vmatmul.mubr.f32.gmra.mxu0 %v487
    %v1037 = vpop.f32.mrf.mxu0
    %v1038 = vadd.f32 0.0, %v1037
    %v1039 = vpop.f32.mrf.mxu0
    %1040 = vdwg.mxu0
    %v1041 = vsel %vm89, %v952, 0
    %1043 = vmatprep.subr.mxu0 0.0
    %1044 = vmatpush1.msra.mxu0 0.0
    %1045 = vmatprep.subr.mxu0 0.0
    %1046 = vmatpush1.msra.mxu0 0.0
    %1047 = vmatprep.subr.mxu0 0.0
    %1048 = vmatpush1.msra.mxu0 0.0
    %1049 = vmatprep.subr.mxu0 0.0
    %1050 = vmatpush1.msra.mxu0 0.0
    %1051 = vmatprep.subr.mxu0 0.0
    %1052 = vmatpush1.msra.mxu0 0.0
    %1053 = vmatprep.subr.mxu0 0.0
    %1054 = vmatpush1.msra.mxu0 0.0
    %1055 = vmatprep.subr.mxu0 0.0
    %1056 = vmatpush1.msra.mxu0 0.0
    %1057 = vmatprep.subr.mxu0 0.0
    %1058 = vmatpush1.msra.mxu0 0.0
    %1059 = vmatprep.subr.mxu0 0.0
    %1060 = vmatpush1.msra.mxu0 0.0
    %1061 = vmatprep.subr.mxu0 0.0
    %1062 = vmatpush1.msra.mxu0 0.0
    %1063 = vmatprep.subr.mxu0 0.0
    %1064 = vmatpush1.msra.mxu0 0.0
    %1065 = vmatprep.subr.mxu0 0.0
    %1066 = vmatpush1.msra.mxu0 0.0
    %1067 = vmatprep.subr.mxu0 0.0
    %1068 = vmatpush1.msra.mxu0 %v965
    %1069 = vmatprep.subr.mxu0 0.0
    %1070 = vmatpush1.msra.mxu0 %v964
    %1071 = vmatprep.subr.mxu0 0.0
    %1072 = vmatpush1.msra.mxu0 %v963
    %1073 = vmatprep.subr.mxu0 0.0
    %1074 = vmatpush1.msra.mxu0 %v962
    %1075 = vmatprep.subr.mxu0 0.0
    %1076 = vmatpush2.msra.mxu0 0.0
    %1077 = vmatprep.subr.mxu0 0.0
    %1078 = vmatpush2.msra.mxu0 0.0
    %1079 = vmatprep.subr.mxu0 0.0
    %1080 = vmatpush2.msra.mxu0 0.0
    %1081 = vmatprep.subr.mxu0 0.0
    %1082 = vmatpush2.msra.mxu0 0.0
    %1083 = vmatprep.subr.mxu0 0.0
    %1084 = vmatpush2.msra.mxu0 0.0
    %1085 = vmatprep.subr.mxu0 0.0
    %1086 = vmatpush2.msra.mxu0 0.0
    %1087 = vmatprep.subr.mxu0 0.0
    %1088 = vmatpush2.msra.mxu0 0.0
    %1089 = vmatprep.subr.mxu0 0.0
    %1090 = vmatpush2.msra.mxu0 0.0
    %1091 = vmatprep.subr.mxu0 0.0
    %1092 = vmatpush2.msra.mxu0 0.0
    %1093 = vmatprep.subr.mxu0 0.0
    %1094 = vmatpush2.msra.mxu0 0.0
    %1095 = vmatprep.subr.mxu0 0.0
    %1096 = vmatpush2.msra.mxu0 0.0
    %1097 = vmatprep.subr.mxu0 0.0
    %1098 = vmatpush2.msra.mxu0 0.0
    %1099 = vmatprep.subr.mxu0 0.0
    %1100 = vmatpush2.msra.mxu0 0.0
    %1101 = vmatprep.subr.mxu0 0.0
    %1102 = vmatpush2.msra.mxu0 0.0
    %1103 = vmatprep.subr.mxu0 0.0
    %1104 = vmatpush2.msra.mxu0 0.0
    %1105 = vmatprep.subr.mxu0 0.0
    %1106 = vmatpush2.msra.mxu0 0.0
    %1107 = vmatprep.mubr.f32.mxu0 0.0
    %1108 = vmatmul.mubr.f32.gmra.mxu0 %v1041
    %v1109 = vpop.f32.mrf.mxu0
    %v1110 = vadd.f32 %v1038, %v1109
    %v1111 = vpop.f32.mrf.mxu0
    %1112 = vdwg.mxu0
    %v1113 = vlaneseq
    %v1114 = vshrl.u32 %v1113, 7
    %v1115 = vsub.s32 0, %v1114
    %v1116 = vrot.slane %v970, %v1115
    %v1117 = vadd.f32 %v1110, %v1116
    %vm1118 = vcmask 191488
    %1119 = vst.msk [vmem:[#allocation10] sm:$0xf] %vm1118, %v1117
    // Predicated region
    $region34: #{decoder_attention_forward.1} parent=1 // pred_check
      _
    $region35: #{decoder_attention_forward.1} parent=1 // pred_check_branch
      %1121 = sbr.rel (0) target = $region37
    $region36: #{decoder_attention_forward.1} parent=1 // pred_region
      %s1123 = ssub.s32 64, 64
      %1124 = vsyncadd [#allocation4], %s1123
      %s1126 = sshll.u32 [#allocation10], 4
      %s1127 = int_to_ptr.vmem [resolvable:$true] %s1126
      %1129 = dma.vmem_to_hbm [thread:$0]  %s1127, 64, %s4, [#allocation4]
    $region37: #{decoder_attention_forward.1} parent=1 // pred_fallthru
      _
    // Predicated region
    $region38: #{decoder_attention_forward.1} parent=1 // pred_check
      _
    $region39: #{decoder_attention_forward.1} parent=1 // pred_check_branch
      %1131 = sbr.rel (0) target = $region41
    $region40: #{decoder_attention_forward.1} parent=1 // pred_region
      %s1133 = ssub.s32 256, 256
      %1134 = vsyncadd [#allocation12], %s1133
      %s1135 = sshll.u32 [#allocation11], 4
      %s1136 = int_to_ptr.vmem [resolvable:$true] %s1135
      %1141 = dma.vmem_to_hbm [thread:$0]  %s1136, 256, %s5, [#allocation12], 64, 64, 4
    $region41: #{decoder_attention_forward.1} parent=1 // pred_fallthru
      _
    // Predicated region
    $region42: #{decoder_attention_forward.1} parent=1 // pred_check
      _
    $region43: #{decoder_attention_forward.1} parent=1 // pred_check_branch
      %1143 = sbr.rel (0) target = $region45
    $region44: #{decoder_attention_forward.1} parent=1 // pred_region
      %1144 = dma.done [#allocation4], 64
    $region45: #{decoder_attention_forward.1} parent=1 // pred_fallthru
      _
    // Predicated region
    $region46: #{decoder_attention_forward.1} parent=1 // pred_check
      _
    $region47: #{decoder_attention_forward.1} parent=1 // pred_check_branch
      %1146 = sbr.rel (0) target = $region49
    $region48: #{decoder_attention_forward.1} parent=1 // pred_region
      %1147 = dma.done [#allocation12], 256
    $region49: #{decoder_attention_forward.1} parent=1 // pred_fallthru
      _
    %1148 = vsyncpa [#allocation3], 1
    %1149 = vsyncpa [#allocation8], 1
    %1150 = vsyncpa [#allocation4], 1
    %1151 = vsyncpa [#allocation12], 1
    %1152 = vsyncpa [#allocation5], 1

</llo_original>
